<compile_context>
chip_gen: v7x
topology: tpu7x:2x2x1
jax: 0.10.0
libtpu: 0.0.40
codegen_flags: <defaults>
</compile_context>

<pallas_src>
import functools

import jax
import jax.numpy as jnp
from jax.experimental import pallas as pl
from jax.experimental.pallas import tpu as pltpu


# ------------------------------ Pallas kernel ------------------------------

def _ssa_kernel(x_ref, wq_ref, wk_ref, wv_ref, wp_ref,
                bq_ref, bk_ref, bv_ref, bp_ref, mask_ref,
                o_ref,
                vq_ref, vk_ref, vv_ref, va_ref, vp_ref,
                *, num_heads, bb, n_tokens, scale, inv_tau,
                v_threshold, attn_threshold):
    """One (batch-block, time-step) grid step of the fused SSA forward."""
    t = pl.program_id(1)

    # Reset all LIF membrane potentials at the first time step of each batch
    # block (VMEM scratch persists across grid steps; time is innermost).
    @pl.when(t == 0)
    def _():
        vq_ref[...] = jnp.zeros_like(vq_ref)
        vk_ref[...] = jnp.zeros_like(vk_ref)
        vv_ref[...] = jnp.zeros_like(vv_ref)
        va_ref[...] = jnp.zeros_like(va_ref)
        vp_ref[...] = jnp.zeros_like(vp_ref)

    def lif(v_ref, u, threshold):
        # spikingjelly LIFNode: tau=2, decay_input=True, v_reset=0 (hard reset)
        v = v_ref[...]
        h = v + (u - v) * inv_tau
        spike = h >= threshold
        v_ref[...] = jnp.where(spike, 0.0, h)
        return spike                                   # bool, cast by caller

    x = x_ref[...]                                     # (bb*N, C) bf16 tokens

    # --- q / k / v branches: 1x1 conv (BN folded into weights) + LIF -------
    q_pre = jnp.dot(x, wq_ref[...],
                    preferred_element_type=jnp.float32) + bq_ref[...]
    k_pre = jnp.dot(x, wk_ref[...],
                    preferred_element_type=jnp.float32) + bk_ref[...]
    v_pre = jnp.dot(x, wv_ref[...],
                    preferred_element_type=jnp.float32) + bv_ref[...]
    q_s = lif(vq_ref, q_pre, v_threshold).astype(jnp.bfloat16)   # {0,1}
    k_s = lif(vk_ref, k_pre, v_threshold).astype(jnp.bfloat16)
    v_s = lif(vv_ref, v_pre, v_threshold).astype(jnp.bfloat16)

    # --- per-head attention, lane-dense via a block-diagonal head mask -----
    # mask[h*N + m, c] = 1 iff channel c belongs to head h.
    mask = mask_ref[...]                               # (H*N, C) bf16 0/1
    y_parts = []
    for bi in range(bb):                               # static unroll over bb
        lo = bi * n_tokens
        q_b = q_s[lo:lo + n_tokens]                    # (N, C)
        k_b = k_s[lo:lo + n_tokens]
        v_b = v_s[lo:lo + n_tokens]
        k_blk = jnp.concatenate([k_b] * num_heads, axis=0) * mask  # (H*N, C)
        v_blk = jnp.concatenate([v_b] * num_heads, axis=0) * mask
        # attn[n, h*N + m] = sum_c q[n,c] * k[m,c] * [head(c) == h]
        attn = jnp.einsum("nc,jc->nj", q_b, k_blk,
                          preferred_element_type=jnp.float32)      # (N, H*N)
        # y[n, c] = scale * sum_m attn_{head(c)}[n, m] * v[m, c]
        y_b = jnp.dot(attn.astype(jnp.bfloat16), v_blk,
                      preferred_element_type=jnp.float32) * scale  # (N, C)
        y_parts.append(y_b)
    y = jnp.concatenate(y_parts, axis=0)               # (bb*N, C) f32

    a_s = lif(va_ref, y, attn_threshold).astype(jnp.bfloat16)   # attn_lif 0.5

    # --- projection: 1x1 conv (+bias, BN folded) + LIF ---------------------
    p_pre = jnp.dot(a_s, wp_ref[...],
                    preferred_element_type=jnp.float32) + bp_ref[...]
    out_s = lif(vp_ref, p_pre, v_threshold)
    o_ref[...] = out_s.astype(o_ref.dtype)


# ------------------------------ JAX wrapper ---------------------------------

def _head_mask(num_heads, n_tokens, dim):
    d = dim // num_heads
    row_head = jnp.arange(num_heads * n_tokens, dtype=jnp.int32) // n_tokens
    col_head = jnp.arange(dim, dtype=jnp.int32) // d
    return (row_head[:, None] == col_head[None, :]).astype(jnp.bfloat16)


@functools.partial(jax.jit, static_argnames=("num_heads", "scale"))
def ssa_forward(x, q_params, k_params, v_params, proj_params, *,
                num_heads, scale):
    """x: (T, B, C, N) float32 (PyTorch layout). Returns (T, B, C, N) spikes."""
    T, B, C, N = x.shape
    assert C % num_heads == 0

    # Batch block: largest divisor of B with bb*N rows <= 512 (sublane fill
    # for the conv matmuls without blowing up VMEM / per-step intermediates).
    bb = 1
    for cand in range(1, B + 1):
        if B % cand == 0 and cand * N <= 512:
            bb = cand

    # channels-last token layout (C on the lane dim); bf16 MXU operands.
    x_tok = jnp.transpose(x, (0, 1, 3, 2)).reshape(T, B * N, C)
    x_tok = x_tok.astype(jnp.bfloat16)                            # (T, B*N, C)

    wq = q_params["w_mat"].astype(jnp.bfloat16)
    wk = k_params["w_mat"].astype(jnp.bfloat16)
    wv = v_params["w_mat"].astype(jnp.bfloat16)
    wp = proj_params["w_mat"].astype(jnp.bfloat16)
    bq, bk, bv, bp = (q_params["bias"], k_params["bias"],
                      v_params["bias"], proj_params["bias"])
    mask = _head_mask(num_heads, N, C)                            # (H*N, C)

    kernel = functools.partial(
        _ssa_kernel, num_heads=num_heads, bb=bb, n_tokens=N,
        scale=float(scale), inv_tau=0.5, v_threshold=1.0, attn_threshold=0.5)

    rows = bb * N
    act_spec = pl.BlockSpec((None, rows, C), lambda b, t: (t, b, 0))
    w_spec = pl.BlockSpec((C, C), lambda b, t: (0, 0))
    b_spec = pl.BlockSpec((1, C), lambda b, t: (0, 0))
    m_spec = pl.BlockSpec((num_heads * N, C), lambda b, t: (0, 0))

    out_tok = pl.pallas_call(
        kernel,
        out_shape=jax.ShapeDtypeStruct((T, B * N, C), jnp.float32),
        grid=(B // bb, T),   # time innermost: LIF state is sequential over T
        in_specs=[act_spec, w_spec, w_spec, w_spec, w_spec,
                  b_spec, b_spec, b_spec, b_spec, m_spec],
        out_specs=act_spec,
        scratch_shapes=[pltpu.VMEM((rows, C), jnp.float32) for _ in range(5)],
        compiler_params=pltpu.CompilerParams(
            dimension_semantics=("parallel", "arbitrary")),
    )(x_tok, wq, wk, wv, wp, bq, bk, bv, bp, mask)

    out_tok = out_tok.reshape(T, B, N, C)
    return jnp.transpose(out_tok, (0, 1, 3, 2))                   # (T, B, C, N)


# --------------------------- synthetic parameters ---------------------------

def _fold_bn(gamma, beta, mean, var, eps=1e-5):
    scale = gamma / jnp.sqrt(var + eps)
    bias = beta - mean * scale
    return scale, bias


def make_branch_params(key, dim, conv_bias=False):
    """Synthetic eval-mode params for Conv1d(dim, dim, 1) + BatchNorm1d(dim),
    folded into a single (dim_in, dim_out) matmul + per-channel bias."""
    kw, kb, kg, kbe, km, kv = jax.random.split(key, 6)
    w = jax.random.normal(kw, (dim, dim), jnp.float32) * (2.0 / jnp.sqrt(dim))
    gamma = 1.0 + 0.1 * jax.random.normal(kg, (dim,), jnp.float32)
    beta = 0.1 * jax.random.normal(kbe, (dim,), jnp.float32)
    mean = 0.1 * jax.random.normal(km, (dim,), jnp.float32)
    var = 1.0 + 0.1 * jax.random.uniform(kv, (dim,), jnp.float32)
    scale, bias = _fold_bn(gamma, beta, mean, var)
    if conv_bias:
        b = 0.1 * jax.random.normal(kb, (dim,), jnp.float32)
        bias = bias + scale * b
    w_eff = w * scale[:, None]           # fold BN scale into the conv weight
    return {"w_mat": jnp.transpose(w_eff),       # (C_in, C_out): x_tok @ w_mat
            "bias": bias.reshape(1, dim).astype(jnp.float32)}


class SSAPallas:
    """JAX/Pallas re-implementation of SSA.forward (eval-mode BN folded,
    multi-step LIF neurons, fixed 0.25 attention scale).
    Input / output: (T, B, C, N) float32 (output values are {0, 1} spikes)."""

    def __init__(self, dim, num_heads=8, seed=0):
        assert dim % num_heads == 0
        self.dim = dim
        self.num_heads = num_heads
        self.scale = 0.25
        keys = jax.random.split(jax.random.PRNGKey(seed), 4)
        self.q_params = make_branch_params(keys[0], dim)
        self.k_params = make_branch_params(keys[1], dim)
        self.v_params = make_branch_params(keys[2], dim)
        self.proj_params = make_branch_params(keys[3], dim, conv_bias=True)

    def __call__(self, x):
        return ssa_forward(x, self.q_params, self.k_params, self.v_params,
                           self.proj_params, num_heads=self.num_heads,
                           scale=self.scale)


# ------------------------------ pure-JAX reference --------------------------

def _lif_scan(u, threshold, tau=2.0):
    """Multi-step LIF over the leading (time) axis; returns binary spikes."""
    def step(v, ut):
        h = v + (ut - v) / tau
        s = (h >= threshold).astype(jnp.float32)
        return h * (1.0 - s), s
    _, spikes = jax.lax.scan(step, jnp.zeros_like(u[0]), u)
    return spikes


def ssa_reference(x, q_params, k_params, v_params, proj_params, num_heads,
                  scale):
    """Pure-JAX reference with the same bf16 matmul-operand rounding."""
    T, B, C, N = x.shape
    d = C // num_heads
    x_tok = jnp.transpose(x, (0, 1, 3, 2))                        # (T,B,N,C)

    def conv_bn(tok, params):
        w = params["w_mat"].astype(jnp.bfloat16)
        return jnp.einsum("tbnc,cd->tbnd", tok.astype(jnp.bfloat16), w,
                          preferred_element_type=jnp.float32) + params["bias"]

    q_s = _lif_scan(conv_bn(x_tok, q_params), 1.0)
    k_s = _lif_scan(conv_bn(x_tok, k_params), 1.0)
    v_s = _lif_scan(conv_bn(x_tok, v_params), 1.0)

    def to_heads(a):                                   # (T,B,N,C)->(T,B,H,N,d)
        return a.reshape(T, B, N, num_heads, d).transpose(0, 1, 3, 2, 4)

    qh, kh, vh = to_heads(q_s), to_heads(k_s), to_heads(v_s)
    attn = jnp.einsum("tbhnd,tbhmd->tbhnm", qh, kh)
    y = jnp.einsum("tbhnm,tbhmd->tbhnd", attn, vh) * scale
    y_tok = y.transpose(0, 1, 3, 2, 4).reshape(T, B, N, C)
    a_s = _lif_scan(y_tok, 0.5)                        # attn_lif, thr = 0.5
    p_pre = conv_bn(a_s, proj_params)
    out = _lif_scan(p_pre, 1.0)
    return jnp.transpose(out, (0, 1, 3, 2))            # (T, B, C, N)


if __name__ == "__main__":
    # SSA(dim=32, num_heads=8) on a small (T=4, B=2, C=32, N=16) input.
    T, B, C, N = 4, 2, 32, 16
    num_heads = 8

    x = jax.random.normal(jax.random.PRNGKey(0), (T, B, C, N), jnp.float32)
    ssa = SSAPallas(dim=C, num_heads=num_heads, seed=0)

    out = jax.block_until_ready(ssa(x))
    assert out.shape == (T, B, C, N), out.shape
    assert out.dtype == jnp.float32
    # proj_lif output must be binary spikes.
    assert bool(jnp.all((out == 0.0) | (out == 1.0)))

    # Compare against the pure-JAX reference (same bf16 operand rounding).
    ref = ssa_reference(x, ssa.q_params, ssa.k_params, ssa.v_params,
                        ssa.proj_params, num_heads, ssa.scale)
    mismatch = float(jnp.mean(jnp.abs(out - ref)))
    assert mismatch < 0.05, f"spike mismatch fraction {mismatch}"
    print("KERNEL_OK")
</pallas_src>

<mosaic_0001>
module attributes {stable_mosaic.version = 11 : i64} {
  func.func @_ssa_kernel(%arg0: i32, %arg1: i32, %arg2: memref<1x32x32xbf16, #tpu.memory_space<vmem>>, %arg3: memref<32x32xbf16, #tpu.memory_space<vmem>>, %arg4: memref<32x32xbf16, #tpu.memory_space<vmem>>, %arg5: memref<32x32xbf16, #tpu.memory_space<vmem>>, %arg6: memref<32x32xbf16, #tpu.memory_space<vmem>>, %arg7: memref<1x32xf32, #tpu.memory_space<vmem>>, %arg8: memref<1x32xf32, #tpu.memory_space<vmem>>, %arg9: memref<1x32xf32, #tpu.memory_space<vmem>>, %arg10: memref<1x32xf32, #tpu.memory_space<vmem>>, %arg11: memref<128x32xbf16, #tpu.memory_space<vmem>>, %arg12: memref<1x32x32xf32, #tpu.memory_space<vmem>>, %arg13: memref<32x32xf32, #tpu.memory_space<vmem>>, %arg14: memref<32x32xf32, #tpu.memory_space<vmem>>, %arg15: memref<32x32xf32, #tpu.memory_space<vmem>>, %arg16: memref<32x32xf32, #tpu.memory_space<vmem>>, %arg17: memref<32x32xf32, #tpu.memory_space<vmem>>) attributes {dimension_semantics = [#tpu.dimension_semantics<parallel>, #tpu.dimension_semantics<arbitrary>], iteration_bounds = array<i64: 1, 4>, scalar_prefetch = 0 : i64, scratch_operands = 5 : i64, tpu.core_type = #tpu.core_type<tc>, window_params = [{transform_indices = @transform_0, window_bounds = array<i64: 1, 32, 32>}, {pipeline_mode = #tpu.pipeline_mode<synchronous>, transform_indices = @transform_1, window_bounds = array<i64: 32, 32>}, {pipeline_mode = #tpu.pipeline_mode<synchronous>, transform_indices = @transform_2, window_bounds = array<i64: 32, 32>}, {pipeline_mode = #tpu.pipeline_mode<synchronous>, transform_indices = @transform_3, window_bounds = array<i64: 32, 32>}, {pipeline_mode = #tpu.pipeline_mode<synchronous>, transform_indices = @transform_4, window_bounds = array<i64: 32, 32>}, {pipeline_mode = #tpu.pipeline_mode<synchronous>, transform_indices = @transform_5, window_bounds = array<i64: 1, 32>}, {pipeline_mode = #tpu.pipeline_mode<synchronous>, transform_indices = @transform_6, window_bounds = array<i64: 1, 32>}, {pipeline_mode = #tpu.pipeline_mode<synchronous>, transform_indices = @transform_7, window_bounds = array<i64: 1, 32>}, {pipeline_mode = #tpu.pipeline_mode<synchronous>, transform_indices = @transform_8, window_bounds = array<i64: 1, 32>}, {pipeline_mode = #tpu.pipeline_mode<synchronous>, transform_indices = @transform_9, window_bounds = array<i64: 128, 32>}, {transform_indices = @transform_10, window_bounds = array<i64: 1, 32, 32>}]} {
    %c0_i32 = arith.constant 0 : i32
    %0 = arith.cmpi eq, %arg1, %c0_i32 : i32
    %1 = arith.extui %0 : i1 to i32
    %c0_i32_0 = arith.constant 0 : i32
    %2 = arith.cmpi ne, %1, %c0_i32_0 : i32
    scf.if %2 {
      %cst_68 = arith.constant 0.000000e+00 : f32
      %118 = vector.broadcast %cst_68 : f32 to vector<32x32xf32>
      %c0_69 = arith.constant 0 : index
      %c0_70 = arith.constant 0 : index
      %119 = vector.load %arg13[%c0_69, %c0_70] : memref<32x32xf32, #tpu.memory_space<vmem>>, vector<32x32xf32>
      tpu.vector_store %arg13[%c0_69, %c0_70], %118 {strides = array<i32>} : memref<32x32xf32, #tpu.memory_space<vmem>>, vector<32x32xf32>,
      %cst_71 = arith.constant 0.000000e+00 : f32
      %120 = vector.broadcast %cst_71 : f32 to vector<32x32xf32>
      %c0_72 = arith.constant 0 : index
      %c0_73 = arith.constant 0 : index
      %121 = vector.load %arg14[%c0_72, %c0_73] : memref<32x32xf32, #tpu.memory_space<vmem>>, vector<32x32xf32>
      tpu.vector_store %arg14[%c0_72, %c0_73], %120 {strides = array<i32>} : memref<32x32xf32, #tpu.memory_space<vmem>>, vector<32x32xf32>,
      %cst_74 = arith.constant 0.000000e+00 : f32
      %122 = vector.broadcast %cst_74 : f32 to vector<32x32xf32>
      %c0_75 = arith.constant 0 : index
      %c0_76 = arith.constant 0 : index
      %123 = vector.load %arg15[%c0_75, %c0_76] : memref<32x32xf32, #tpu.memory_space<vmem>>, vector<32x32xf32>
      tpu.vector_store %arg15[%c0_75, %c0_76], %122 {strides = array<i32>} : memref<32x32xf32, #tpu.memory_space<vmem>>, vector<32x32xf32>,
      %cst_77 = arith.constant 0.000000e+00 : f32
      %124 = vector.broadcast %cst_77 : f32 to vector<32x32xf32>
      %c0_78 = arith.constant 0 : index
      %c0_79 = arith.constant 0 : index
      %125 = vector.load %arg16[%c0_78, %c0_79] : memref<32x32xf32, #tpu.memory_space<vmem>>, vector<32x32xf32>
      tpu.vector_store %arg16[%c0_78, %c0_79], %124 {strides = array<i32>} : memref<32x32xf32, #tpu.memory_space<vmem>>, vector<32x32xf32>,
      %cst_80 = arith.constant 0.000000e+00 : f32
      %126 = vector.broadcast %cst_80 : f32 to vector<32x32xf32>
      %c0_81 = arith.constant 0 : index
      %c0_82 = arith.constant 0 : index
      %127 = vector.load %arg17[%c0_81, %c0_82] : memref<32x32xf32, #tpu.memory_space<vmem>>, vector<32x32xf32>
      tpu.vector_store %arg17[%c0_81, %c0_82], %126 {strides = array<i32>} : memref<32x32xf32, #tpu.memory_space<vmem>>, vector<32x32xf32>,
    } else {
    }
    %c0 = arith.constant 0 : index
    %c0_1 = arith.constant 0 : index
    %c0_2 = arith.constant 0 : index
    %3 = vector.load %arg2[%c0, %c0_1, %c0_2] : memref<1x32x32xbf16, #tpu.memory_space<vmem>>, vector<1x32x32xbf16>
    %4 = vector.shape_cast %3 : vector<1x32x32xbf16> to vector<32x32xbf16>
    %c0_3 = arith.constant 0 : index
    %c0_4 = arith.constant 0 : index
    %5 = vector.load %arg3[%c0_3, %c0_4] : memref<32x32xbf16, #tpu.memory_space<vmem>>, vector<32x32xbf16>
    %cst = arith.constant dense<0.000000e+00> : vector<32x32xf32>
    %6 = tpu.matmul %4, %5, %cst {dimension_numbers = #tpu.dot_dimension_numbers<[1], [0], [0], [1], [0, 0, 1, 1], [], []>} : vector<32x32xbf16>, vector<32x32xbf16>, vector<32x32xf32> -> vector<32x32xf32>
    %c0_5 = arith.constant 0 : index
    %c0_6 = arith.constant 0 : index
    %7 = vector.load %arg7[%c0_5, %c0_6] : memref<1x32xf32, #tpu.memory_space<vmem>>, vector<1x32xf32>
    %8 = vector.broadcast %7 : vector<1x32xf32> to vector<32x32xf32>
    %9 = arith.addf %6, %8 : vector<32x32xf32>
    %c0_7 = arith.constant 0 : index
    %c0_8 = arith.constant 0 : index
    %10 = vector.load %arg4[%c0_7, %c0_8] : memref<32x32xbf16, #tpu.memory_space<vmem>>, vector<32x32xbf16>
    %cst_9 = arith.constant dense<0.000000e+00> : vector<32x32xf32>
    %11 = tpu.matmul %4, %10, %cst_9 {dimension_numbers = #tpu.dot_dimension_numbers<[1], [0], [0], [1], [0, 0, 1, 1], [], []>} : vector<32x32xbf16>, vector<32x32xbf16>, vector<32x32xf32> -> vector<32x32xf32>
    %c0_10 = arith.constant 0 : index
    %c0_11 = arith.constant 0 : index
    %12 = vector.load %arg8[%c0_10, %c0_11] : memref<1x32xf32, #tpu.memory_space<vmem>>, vector<1x32xf32>
    %13 = vector.broadcast %12 : vector<1x32xf32> to vector<32x32xf32>
    %14 = arith.addf %11, %13 : vector<32x32xf32>
    %c0_12 = arith.constant 0 : index
    %c0_13 = arith.constant 0 : index
    %15 = vector.load %arg5[%c0_12, %c0_13] : memref<32x32xbf16, #tpu.memory_space<vmem>>, vector<32x32xbf16>
    %cst_14 = arith.constant dense<0.000000e+00> : vector<32x32xf32>
    %16 = tpu.matmul %4, %15, %cst_14 {dimension_numbers = #tpu.dot_dimension_numbers<[1], [0], [0], [1], [0, 0, 1, 1], [], []>} : vector<32x32xbf16>, vector<32x32xbf16>, vector<32x32xf32> -> vector<32x32xf32>
    %c0_15 = arith.constant 0 : index
    %c0_16 = arith.constant 0 : index
    %17 = vector.load %arg9[%c0_15, %c0_16] : memref<1x32xf32, #tpu.memory_space<vmem>>, vector<1x32xf32>
    %18 = vector.broadcast %17 : vector<1x32xf32> to vector<32x32xf32>
    %19 = arith.addf %16, %18 : vector<32x32xf32>
    %c0_17 = arith.constant 0 : index
    %c0_18 = arith.constant 0 : index
    %20 = vector.load %arg13[%c0_17, %c0_18] : memref<32x32xf32, #tpu.memory_space<vmem>>, vector<32x32xf32>
    %21 = arith.subf %9, %20 : vector<32x32xf32>
    %cst_19 = arith.constant 5.000000e-01 : f32
    %22 = vector.broadcast %cst_19 : f32 to vector<32x32xf32>
    %23 = arith.mulf %21, %22 : vector<32x32xf32>
    %24 = arith.addf %20, %23 : vector<32x32xf32>
    %cst_20 = arith.constant 1.000000e+00 : f32
    %25 = vector.broadcast %cst_20 : f32 to vector<32x32xf32>
    %26 = arith.cmpf oge, %24, %25 : vector<32x32xf32>
    %cst_21 = arith.constant 0.000000e+00 : f32
    %27 = vector.broadcast %cst_21 : f32 to vector<32x32xf32>
    %28 = arith.select %26, %27, %24 : vector<32x32xi1>, vector<32x32xf32>
    %c0_22 = arith.constant 0 : index
    %c0_23 = arith.constant 0 : index
    %29 = vector.load %arg13[%c0_22, %c0_23] : memref<32x32xf32, #tpu.memory_space<vmem>>, vector<32x32xf32>
    tpu.vector_store %arg13[%c0_22, %c0_23], %28 {strides = array<i32>} : memref<32x32xf32, #tpu.memory_space<vmem>>, vector<32x32xf32>,
    %30 = arith.extui %26 : vector<32x32xi1> to vector<32x32xi32>
    %31 = arith.sitofp %30 : vector<32x32xi32> to vector<32x32xf32>
    %32 = arith.truncf %31 : vector<32x32xf32> to vector<32x32xbf16>
    %c0_24 = arith.constant 0 : index
    %c0_25 = arith.constant 0 : index
    %33 = vector.load %arg14[%c0_24, %c0_25] : memref<32x32xf32, #tpu.memory_space<vmem>>, vector<32x32xf32>
    %34 = arith.subf %14, %33 : vector<32x32xf32>
    %cst_26 = arith.constant 5.000000e-01 : f32
    %35 = vector.broadcast %cst_26 : f32 to vector<32x32xf32>
    %36 = arith.mulf %34, %35 : vector<32x32xf32>
    %37 = arith.addf %33, %36 : vector<32x32xf32>
    %cst_27 = arith.constant 1.000000e+00 : f32
    %38 = vector.broadcast %cst_27 : f32 to vector<32x32xf32>
    %39 = arith.cmpf oge, %37, %38 : vector<32x32xf32>
    %cst_28 = arith.constant 0.000000e+00 : f32
    %40 = vector.broadcast %cst_28 : f32 to vector<32x32xf32>
    %41 = arith.select %39, %40, %37 : vector<32x32xi1>, vector<32x32xf32>
    %c0_29 = arith.constant 0 : index
    %c0_30 = arith.constant 0 : index
    %42 = vector.load %arg14[%c0_29, %c0_30] : memref<32x32xf32, #tpu.memory_space<vmem>>, vector<32x32xf32>
    tpu.vector_store %arg14[%c0_29, %c0_30], %41 {strides = array<i32>} : memref<32x32xf32, #tpu.memory_space<vmem>>, vector<32x32xf32>,
    %43 = arith.extui %39 : vector<32x32xi1> to vector<32x32xi32>
    %44 = arith.sitofp %43 : vector<32x32xi32> to vector<32x32xf32>
    %45 = arith.truncf %44 : vector<32x32xf32> to vector<32x32xbf16>
    %c0_31 = arith.constant 0 : index
    %c0_32 = arith.constant 0 : index
    %46 = vector.load %arg15[%c0_31, %c0_32] : memref<32x32xf32, #tpu.memory_space<vmem>>, vector<32x32xf32>
    %47 = arith.subf %19, %46 : vector<32x32xf32>
    %cst_33 = arith.constant 5.000000e-01 : f32
    %48 = vector.broadcast %cst_33 : f32 to vector<32x32xf32>
    %49 = arith.mulf %47, %48 : vector<32x32xf32>
    %50 = arith.addf %46, %49 : vector<32x32xf32>
    %cst_34 = arith.constant 1.000000e+00 : f32
    %51 = vector.broadcast %cst_34 : f32 to vector<32x32xf32>
    %52 = arith.cmpf oge, %50, %51 : vector<32x32xf32>
    %cst_35 = arith.constant 0.000000e+00 : f32
    %53 = vector.broadcast %cst_35 : f32 to vector<32x32xf32>
    %54 = arith.select %52, %53, %50 : vector<32x32xi1>, vector<32x32xf32>
    %c0_36 = arith.constant 0 : index
    %c0_37 = arith.constant 0 : index
    %55 = vector.load %arg15[%c0_36, %c0_37] : memref<32x32xf32, #tpu.memory_space<vmem>>, vector<32x32xf32>
    tpu.vector_store %arg15[%c0_36, %c0_37], %54 {strides = array<i32>} : memref<32x32xf32, #tpu.memory_space<vmem>>, vector<32x32xf32>,
    %56 = arith.extui %52 : vector<32x32xi1> to vector<32x32xi32>
    %57 = arith.sitofp %56 : vector<32x32xi32> to vector<32x32xf32>
    %58 = arith.truncf %57 : vector<32x32xf32> to vector<32x32xbf16>
    %c0_38 = arith.constant 0 : index
    %c0_39 = arith.constant 0 : index
    %59 = vector.load %arg11[%c0_38, %c0_39] : memref<128x32xbf16, #tpu.memory_space<vmem>>, vector<128x32xbf16>
    %60 = vector.extract_strided_slice %32 {offsets = [0, 0], sizes = [16, 32], strides = [1, 1]} : vector<32x32xbf16> to vector<16x32xbf16>
    %61 = vector.extract_strided_slice %45 {offsets = [0, 0], sizes = [16, 32], strides = [1, 1]} : vector<32x32xbf16> to vector<16x32xbf16>
    %62 = vector.extract_strided_slice %58 {offsets = [0, 0], sizes = [16, 32], strides = [1, 1]} : vector<32x32xbf16> to vector<16x32xbf16>
    %63 = tpu.concatenate %61, %61, %61, %61, %61, %61, %61, %61 in 0 : vector<16x32xbf16>, vector<16x32xbf16>, vector<16x32xbf16>, vector<16x32xbf16>, vector<16x32xbf16>, vector<16x32xbf16>, vector<16x32xbf16>, vector<16x32xbf16> -> vector<128x32xbf16>
    %64 = arith.mulf %63, %59 : vector<128x32xbf16>
    %65 = tpu.concatenate %62, %62, %62, %62, %62, %62, %62, %62 in 0 : vector<16x32xbf16>, vector<16x32xbf16>, vector<16x32xbf16>, vector<16x32xbf16>, vector<16x32xbf16>, vector<16x32xbf16>, vector<16x32xbf16>, vector<16x32xbf16> -> vector<128x32xbf16>
    %66 = arith.mulf %65, %59 : vector<128x32xbf16>
    "tpu.trace_start"() <{level = 10 : i32, message = "nc,jc->nj"}> : () -> ()
    %cst_40 = arith.constant dense<0.000000e+00> : vector<16x128xf32>
    %67 = tpu.matmul %60, %64, %cst_40 {dimension_numbers = #tpu.dot_dimension_numbers<[1], [1], [0], [0], [0, 0, 1, 0], [], []>} : vector<16x32xbf16>, vector<128x32xbf16>, vector<16x128xf32> -> vector<16x128xf32>
    "tpu.trace_stop"() : () -> ()
    %68 = arith.truncf %67 : vector<16x128xf32> to vector<16x128xbf16>
    %cst_41 = arith.constant dense<0.000000e+00> : vector<16x32xf32>
    %69 = tpu.matmul %68, %66, %cst_41 {dimension_numbers = #tpu.dot_dimension_numbers<[1], [0], [0], [1], [0, 0, 1, 1], [], []>} : vector<16x128xbf16>, vector<128x32xbf16>, vector<16x32xf32> -> vector<16x32xf32>
    %cst_42 = arith.constant 2.500000e-01 : f32
    %70 = vector.broadcast %cst_42 : f32 to vector<16x32xf32>
    %71 = arith.mulf %69, %70 : vector<16x32xf32>
    %72 = vector.extract_strided_slice %32 {offsets = [16, 0], sizes = [16, 32], strides = [1, 1]} : vector<32x32xbf16> to vector<16x32xbf16>
    %73 = vector.extract_strided_slice %45 {offsets = [16, 0], sizes = [16, 32], strides = [1, 1]} : vector<32x32xbf16> to vector<16x32xbf16>
    %74 = vector.extract_strided_slice %58 {offsets = [16, 0], sizes = [16, 32], strides = [1, 1]} : vector<32x32xbf16> to vector<16x32xbf16>
    %75 = tpu.concatenate %73, %73, %73, %73, %73, %73, %73, %73 in 0 : vector<16x32xbf16>, vector<16x32xbf16>, vector<16x32xbf16>, vector<16x32xbf16>, vector<16x32xbf16>, vector<16x32xbf16>, vector<16x32xbf16>, vector<16x32xbf16> -> vector<128x32xbf16>
    %76 = arith.mulf %75, %59 : vector<128x32xbf16>
    %77 = tpu.concatenate %74, %74, %74, %74, %74, %74, %74, %74 in 0 : vector<16x32xbf16>, vector<16x32xbf16>, vector<16x32xbf16>, vector<16x32xbf16>, vector<16x32xbf16>, vector<16x32xbf16>, vector<16x32xbf16>, vector<16x32xbf16> -> vector<128x32xbf16>
    %78 = arith.mulf %77, %59 : vector<128x32xbf16>
    "tpu.trace_start"() <{level = 10 : i32, message = "nc,jc->nj"}> : () -> ()
    %cst_43 = arith.constant dense<0.000000e+00> : vector<16x128xf32>
    %79 = tpu.matmul %72, %76, %cst_43 {dimension_numbers = #tpu.dot_dimension_numbers<[1], [1], [0], [0], [0, 0, 1, 0], [], []>} : vector<16x32xbf16>, vector<128x32xbf16>, vector<16x128xf32> -> vector<16x128xf32>
    "tpu.trace_stop"() : () -> ()
    %80 = arith.truncf %79 : vector<16x128xf32> to vector<16x128xbf16>
    %cst_44 = arith.constant dense<0.000000e+00> : vector<16x32xf32>
    %81 = tpu.matmul %80, %78, %cst_44 {dimension_numbers = #tpu.dot_dimension_numbers<[1], [0], [0], [1], [0, 0, 1, 1], [], []>} : vector<16x128xbf16>, vector<128x32xbf16>, vector<16x32xf32> -> vector<16x32xf32>
    %cst_45 = arith.constant 2.500000e-01 : f32
    %82 = vector.broadcast %cst_45 : f32 to vector<16x32xf32>
    %83 = arith.mulf %81, %82 : vector<16x32xf32>
    %84 = tpu.concatenate %71, %83 in 0 : vector<16x32xf32>, vector<16x32xf32> -> vector<32x32xf32>
    %c0_46 = arith.constant 0 : index
    %c0_47 = arith.constant 0 : index
    %85 = vector.load %arg16[%c0_46, %c0_47] : memref<32x32xf32, #tpu.memory_space<vmem>>, vector<32x32xf32>
    %86 = arith.subf %84, %85 : vector<32x32xf32>
    %cst_48 = arith.constant 5.000000e-01 : f32
    %87 = vector.broadcast %cst_48 : f32 to vector<32x32xf32>
    %88 = arith.mulf %86, %87 : vector<32x32xf32>
    %89 = arith.addf %85, %88 : vector<32x32xf32>
    %cst_49 = arith.constant 5.000000e-01 : f32
    %90 = vector.broadcast %cst_49 : f32 to vector<32x32xf32>
    %91 = arith.cmpf oge, %89, %90 : vector<32x32xf32>
    %cst_50 = arith.constant 0.000000e+00 : f32
    %92 = vector.broadcast %cst_50 : f32 to vector<32x32xf32>
    %93 = arith.select %91, %92, %89 : vector<32x32xi1>, vector<32x32xf32>
    %c0_51 = arith.constant 0 : index
    %c0_52 = arith.constant 0 : index
    %94 = vector.load %arg16[%c0_51, %c0_52] : memref<32x32xf32, #tpu.memory_space<vmem>>, vector<32x32xf32>
    tpu.vector_store %arg16[%c0_51, %c0_52], %93 {strides = array<i32>} : memref<32x32xf32, #tpu.memory_space<vmem>>, vector<32x32xf32>,
    %95 = arith.extui %91 : vector<32x32xi1> to vector<32x32xi32>
    %96 = arith.sitofp %95 : vector<32x32xi32> to vector<32x32xf32>
    %97 = arith.truncf %96 : vector<32x32xf32> to vector<32x32xbf16>
    %c0_53 = arith.constant 0 : index
    %c0_54 = arith.constant 0 : index
    %98 = vector.load %arg6[%c0_53, %c0_54] : memref<32x32xbf16, #tpu.memory_space<vmem>>, vector<32x32xbf16>
    %cst_55 = arith.constant dense<0.000000e+00> : vector<32x32xf32>
    %99 = tpu.matmul %97, %98, %cst_55 {dimension_numbers = #tpu.dot_dimension_numbers<[1], [0], [0], [1], [0, 0, 1, 1], [], []>} : vector<32x32xbf16>, vector<32x32xbf16>, vector<32x32xf32> -> vector<32x32xf32>
    %c0_56 = arith.constant 0 : index
    %c0_57 = arith.constant 0 : index
    %100 = vector.load %arg10[%c0_56, %c0_57] : memref<1x32xf32, #tpu.memory_space<vmem>>, vector<1x32xf32>
    %101 = vector.broadcast %100 : vector<1x32xf32> to vector<32x32xf32>
    %102 = arith.addf %99, %101 : vector<32x32xf32>
    %c0_58 = arith.constant 0 : index
    %c0_59 = arith.constant 0 : index
    %103 = vector.load %arg17[%c0_58, %c0_59] : memref<32x32xf32, #tpu.memory_space<vmem>>, vector<32x32xf32>
    %104 = arith.subf %102, %103 : vector<32x32xf32>
    %cst_60 = arith.constant 5.000000e-01 : f32
    %105 = vector.broadcast %cst_60 : f32 to vector<32x32xf32>
    %106 = arith.mulf %104, %105 : vector<32x32xf32>
    %107 = arith.addf %103, %106 : vector<32x32xf32>
    %cst_61 = arith.constant 1.000000e+00 : f32
    %108 = vector.broadcast %cst_61 : f32 to vector<32x32xf32>
    %109 = arith.cmpf oge, %107, %108 : vector<32x32xf32>
    %cst_62 = arith.constant 0.000000e+00 : f32
    %110 = vector.broadcast %cst_62 : f32 to vector<32x32xf32>
    %111 = arith.select %109, %110, %107 : vector<32x32xi1>, vector<32x32xf32>
    %c0_63 = arith.constant 0 : index
    %c0_64 = arith.constant 0 : index
    %112 = vector.load %arg17[%c0_63, %c0_64] : memref<32x32xf32, #tpu.memory_space<vmem>>, vector<32x32xf32>
    tpu.vector_store %arg17[%c0_63, %c0_64], %111 {strides = array<i32>} : memref<32x32xf32, #tpu.memory_space<vmem>>, vector<32x32xf32>,
    %113 = arith.extui %109 : vector<32x32xi1> to vector<32x32xi32>
    %114 = arith.sitofp %113 : vector<32x32xi32> to vector<32x32xf32>
    %c0_65 = arith.constant 0 : index
    %c0_66 = arith.constant 0 : index
    %c0_67 = arith.constant 0 : index
    %115 = vector.load %arg12[%c0_65, %c0_66, %c0_67] : memref<1x32x32xf32, #tpu.memory_space<vmem>>, vector<1x32x32xf32>
    %116 = vector.shape_cast %115 : vector<1x32x32xf32> to vector<32x32xf32>
    %117 = vector.shape_cast %114 : vector<32x32xf32> to vector<1x32x32xf32>
    tpu.vector_store %arg12[%c0_65, %c0_66, %c0_67], %117 {strides = array<i32>} : memref<1x32x32xf32, #tpu.memory_space<vmem>>, vector<1x32x32xf32>,
    return
  }
  func.func @transform_0(%arg0: i32, %arg1: i32) -> (i32, i32, i32) {
    %c0_i32 = arith.constant 0 : i32
    %c0_i32_0 = arith.constant 0 : i32
    return %arg1, %arg0, %c0_i32 : i32, i32, i32
  }
  func.func @transform_1(%arg0: i32, %arg1: i32) -> (i32, i32) {
    %c0_i32 = arith.constant 0 : i32
    %c0_i32_0 = arith.constant 0 : i32
    %c0_i32_1 = arith.constant 0 : i32
    return %c0_i32, %c0_i32_0 : i32, i32
  }
  func.func @transform_2(%arg0: i32, %arg1: i32) -> (i32, i32) {
    %c0_i32 = arith.constant 0 : i32
    %c0_i32_0 = arith.constant 0 : i32
    %c0_i32_1 = arith.constant 0 : i32
    return %c0_i32, %c0_i32_0 : i32, i32
  }
  func.func @transform_3(%arg0: i32, %arg1: i32) -> (i32, i32) {
    %c0_i32 = arith.constant 0 : i32
    %c0_i32_0 = arith.constant 0 : i32
    %c0_i32_1 = arith.constant 0 : i32
    return %c0_i32, %c0_i32_0 : i32, i32
  }
  func.func @transform_4(%arg0: i32, %arg1: i32) -> (i32, i32) {
    %c0_i32 = arith.constant 0 : i32
    %c0_i32_0 = arith.constant 0 : i32
    %c0_i32_1 = arith.constant 0 : i32
    return %c0_i32, %c0_i32_0 : i32, i32
  }
  func.func @transform_5(%arg0: i32, %arg1: i32) -> (i32, i32) {
    %c0_i32 = arith.constant 0 : i32
    %c0_i32_0 = arith.constant 0 : i32
    %c0_i32_1 = arith.constant 0 : i32
    return %c0_i32, %c0_i32_0 : i32, i32
  }
  func.func @transform_6(%arg0: i32, %arg1: i32) -> (i32, i32) {
    %c0_i32 = arith.constant 0 : i32
    %c0_i32_0 = arith.constant 0 : i32
    %c0_i32_1 = arith.constant 0 : i32
    return %c0_i32, %c0_i32_0 : i32, i32
  }
  func.func @transform_7(%arg0: i32, %arg1: i32) -> (i32, i32) {
    %c0_i32 = arith.constant 0 : i32
    %c0_i32_0 = arith.constant 0 : i32
    %c0_i32_1 = arith.constant 0 : i32
    return %c0_i32, %c0_i32_0 : i32, i32
  }
  func.func @transform_8(%arg0: i32, %arg1: i32) -> (i32, i32) {
    %c0_i32 = arith.constant 0 : i32
    %c0_i32_0 = arith.constant 0 : i32
    %c0_i32_1 = arith.constant 0 : i32
    return %c0_i32, %c0_i32_0 : i32, i32
  }
  func.func @transform_9(%arg0: i32, %arg1: i32) -> (i32, i32) {
    %c0_i32 = arith.constant 0 : i32
    %c0_i32_0 = arith.constant 0 : i32
    %c0_i32_1 = arith.constant 0 : i32
    return %c0_i32, %c0_i32_0 : i32, i32
  }
  func.func @transform_10(%arg0: i32, %arg1: i32) -> (i32, i32, i32) {
    %c0_i32 = arith.constant 0 : i32
    %c0_i32_0 = arith.constant 0 : i32
    return %arg1, %arg0, %c0_i32 : i32, i32, i32
  }
}

</mosaic_0001>

<llo_original>
// kernel: ssa_forward.1
$region0: #{ssa_forward.1}
  #allocation0 [shape = 'u32[]', space=smem, size = 0x4, offset = 0x4, fixed_abs, tag = 'smem constant byte address 0x4 - core index']
  #allocation1 [shape = 'u32[144,128]{1,0:T(1,128)}', space=vmem, size = 0x12000, scoped, tag = 'internal scratch']
  #allocation2 [shape = 'f32[32,32]{1,0:T(8,128)}', space=vmem, size = 0x4000, scoped, tag = 'scratch operand']
  #allocation3 [shape = 'f32[32,32]{1,0:T(8,128)}', space=vmem, size = 0x4000, scoped, tag = 'scratch operand']
  #allocation4 [shape = 'f32[32,32]{1,0:T(8,128)}', space=vmem, size = 0x4000, scoped, tag = 'scratch operand']
  #allocation5 [shape = 'f32[32,32]{1,0:T(8,128)}', space=vmem, size = 0x4000, scoped, tag = 'scratch operand']
  #allocation6 [shape = 'f32[32,32]{1,0:T(8,128)}', space=vmem, size = 0x4000, scoped, tag = 'scratch operand']
  %s0 = inlined_call_operand.vmem [shape: bf16[4,32,32], index: 0, kind: input, shape index: {}]
  %s1 = inlined_call_operand.vmem [shape: bf16[32,32], index: 1, kind: input, shape index: {}]
  %s2 = inlined_call_operand.vmem [shape: bf16[32,32], index: 2, kind: input, shape index: {}]
  %s3 = inlined_call_operand.vmem [shape: bf16[32,32], index: 3, kind: input, shape index: {}]
  %s4 = inlined_call_operand.vmem [shape: bf16[32,32], index: 4, kind: input, shape index: {}]
  %s5 = inlined_call_operand.vmem [shape: f32[1,32], index: 5, kind: input, shape index: {}]
  %s6 = inlined_call_operand.vmem [shape: f32[1,32], index: 6, kind: input, shape index: {}]
  %s7 = inlined_call_operand.vmem [shape: f32[1,32], index: 7, kind: input, shape index: {}]
  %s8 = inlined_call_operand.vmem [shape: f32[1,32], index: 8, kind: input, shape index: {}]
  %s9 = inlined_call_operand.vmem [shape: bf16[128,32], index: 9, kind: input, shape index: {}]
  %s10 = inlined_call_operand.hbm [shape: f32[4,32,32], index: 10, kind: output, shape index: {}]
  %s11 = sld [smem:[#allocation0]]
  $region77: #{ssa_forward.1} parent=0
    _
  %s13 = ssub.s32 1, %s11
  %s14 = scalar_select 0, %s13, %s11
  $region1: #{ssa_forward.1} parent=0
    #allocation7 [shape = 'u8[32768]{0}', space=vmem, size = 0x8000, scoped, tag = 'output window, operand 0']
    #allocation8 [shape = 's32[2]{0}', space=sflag, size = 0x8, scoped, tag = 'scoped memory for ssa_forward.1']
    %15 = vsyncpa [#allocation8], 0
    %s16 = scalar_lea.sflag [#allocation8], 1
    %17 = vsyncpa %s16, 0
    loop: start=0, step=1, limit=6
    $region2: #{ssa_forward.1} parent=1 // loop_pre_header
      _
    $region3: #{ssa_forward.1} parent=1 // loop_header
      %s19 = sphi 0, %s23
      %p20 = scmp.ge.s32.totalorder %s19, 6
      %s26 = sphi 0, %s38
      %s27 = sphi 0, %s34
      %s28 = sphi 0, %s26
      %s29 = sphi 0, %s27
      %s30 = sphi 0, %s28
      %s31 = sphi 0, %s29
      %s43 = sphi 0, %s45
      %s46 = sphi 0, %s43
      %s47 = sphi 0, %s46
      %s63 = sphi 0, %s47
      %s67 = sphi 0, %s67
      %s69 = sphi 0, %s67
      %s70 = sphi 0, %s69
      %s84 = sphi 0, %s70
      %s88 = sphi 0, %s88
      %s90 = sphi 0, %s88
      %s91 = sphi 0, %s90
      %s105 = sphi 0, %s91
      %s109 = sphi 0, %s109
      %s111 = sphi 0, %s109
      %s112 = sphi 0, %s111
      %s126 = sphi 0, %s112
      %s130 = sphi 0, %s130
      %s132 = sphi 0, %s130
      %s133 = sphi 0, %s132
      %s147 = sphi 0, %s133
      %s151 = sphi 0, %s151
      %s153 = sphi 0, %s151
      %s154 = sphi 0, %s153
      %s168 = sphi 0, %s154
      %s172 = sphi 0, %s172
      %s174 = sphi 0, %s172
      %s175 = sphi 0, %s174
      %s189 = sphi 0, %s175
      %s193 = sphi 0, %s193
      %s195 = sphi 0, %s193
      %s196 = sphi 0, %s195
      %s210 = sphi 0, %s196
      %s214 = sphi 0, %s214
      %s216 = sphi 0, %s214
      %s217 = sphi 0, %s216
      %s231 = sphi 0, %s217
      %s235 = sphi 0, %s235
      %s237 = sphi 0, %s235
      %s238 = sphi 0, %s237
      %s252 = sphi 0, %s238
      %s260 = sphi 0, %s262
      %s263 = sphi 0, %s260
      %s264 = sphi 0, %s263
      %s280 = sphi 0, %s264
    $region4: #{ssa_forward.1} parent=1 // loop_header_branch
      %22 = sbr.rel (%p20) target = $region8
    $region5: #{ssa_forward.1} parent=1 // loop_body
      %s24 = ssub.s32 %s19, 1
      %s25 = ssub.s32 %s19, 2
      %s32 = sadd.s32 1, %s27
      %p33 = scmp.ge.s32.totalorder %s32, 4
      %s34 = scalar_select %p33, 0, %s32
      %s35 = sadd.s32 1, %s26
      %s36 = scalar_select %p33, %s35, %s26
      %p37 = scmp.ge.s32.totalorder %s36, 1
      %s38 = scalar_select %p37, 0, %s36
      %s39 = ssub.s32 %s27, %s34
      %s40 = ssub.s32 %s26, %s38
      %s41 = sor.u32 %s39, %s40
      %p42 = scmp.eq.s32.totalorder %s41, 0
      %s44 = sadd.s32 %s43, 1
      %s45 = scalar_select %p42, %s43, %s44
      %p48 = pneg %p42
      %p49 = scmp.eq.s32.totalorder %s19, 3
      %p50 = por %p48, %p49
      %p51 = scmp.ne.s32.totalorder %s43, %s46
      %p52 = scmp.eq.s32.totalorder %s19, 0
      %p53 = por %p51, %p52
      %p54 = scmp.ne.s32.totalorder %s43, %s46
      %p55 = scmp.eq.s32.totalorder %s24, 3
      %p56 = por %p54, %p55
      %p57 = scmp.ne.s32.totalorder %s46, %s47
      %p58 = scmp.eq.s32.totalorder %s24, 0
      %p59 = por %p57, %p58
      %p60 = scmp.ne.s32.totalorder %s46, %s47
      %p61 = scmp.eq.s32.totalorder %s25, 3
      %p62 = por %p60, %p61
      %p64 = scmp.ne.s32.totalorder %s47, %s63
      %p65 = scmp.eq.s32.totalorder %s25, 0
      %p66 = por %p64, %p65
      %s68 = sadd.s32 %s67, 1
      %p71 = scmp.eq.s32.totalorder %s19, 3
      %p72 = scmp.ne.s32.totalorder %s67, %s69
      %p73 = scmp.eq.s32.totalorder %s19, 0
      %p74 = por %p72, %p73
      %p75 = scmp.ne.s32.totalorder %s67, %s69
      %p76 = scmp.eq.s32.totalorder %s24, 3
      %p77 = por %p75, %p76
      %p78 = scmp.ne.s32.totalorder %s69, %s70
      %p79 = scmp.eq.s32.totalorder %s24, 0
      %p80 = por %p78, %p79
      %p81 = scmp.ne.s32.totalorder %s69, %s70
      %p82 = scmp.eq.s32.totalorder %s25, 3
      %p83 = por %p81, %p82
      %p85 = scmp.ne.s32.totalorder %s70, %s84
      %p86 = scmp.eq.s32.totalorder %s25, 0
      %p87 = por %p85, %p86
      %s89 = sadd.s32 %s88, 1
      %p92 = scmp.eq.s32.totalorder %s19, 3
      %p93 = scmp.ne.s32.totalorder %s88, %s90
      %p94 = scmp.eq.s32.totalorder %s19, 0
      %p95 = por %p93, %p94
      %p96 = scmp.ne.s32.totalorder %s88, %s90
      %p97 = scmp.eq.s32.totalorder %s24, 3
      %p98 = por %p96, %p97
      %p99 = scmp.ne.s32.totalorder %s90, %s91
      %p100 = scmp.eq.s32.totalorder %s24, 0
      %p101 = por %p99, %p100
      %p102 = scmp.ne.s32.totalorder %s90, %s91
      %p103 = scmp.eq.s32.totalorder %s25, 3
      %p104 = por %p102, %p103
      %p106 = scmp.ne.s32.totalorder %s91, %s105
      %p107 = scmp.eq.s32.totalorder %s25, 0
      %p108 = por %p106, %p107
      %s110 = sadd.s32 %s109, 1
      %p113 = scmp.eq.s32.totalorder %s19, 3
      %p114 = scmp.ne.s32.totalorder %s109, %s111
      %p115 = scmp.eq.s32.totalorder %s19, 0
      %p116 = por %p114, %p115
      %p117 = scmp.ne.s32.totalorder %s109, %s111
      %p118 = scmp.eq.s32.totalorder %s24, 3
      %p119 = por %p117, %p118
      %p120 = scmp.ne.s32.totalorder %s111, %s112
      %p121 = scmp.eq.s32.totalorder %s24, 0
      %p122 = por %p120, %p121
      %p123 = scmp.ne.s32.totalorder %s111, %s112
      %p124 = scmp.eq.s32.totalorder %s25, 3
      %p125 = por %p123, %p124
      %p127 = scmp.ne.s32.totalorder %s112, %s126
      %p128 = scmp.eq.s32.totalorder %s25, 0
      %p129 = por %p127, %p128
      %s131 = sadd.s32 %s130, 1
      %p134 = scmp.eq.s32.totalorder %s19, 3
      %p135 = scmp.ne.s32.totalorder %s130, %s132
      %p136 = scmp.eq.s32.totalorder %s19, 0
      %p137 = por %p135, %p136
      %p138 = scmp.ne.s32.totalorder %s130, %s132
      %p139 = scmp.eq.s32.totalorder %s24, 3
      %p140 = por %p138, %p139
      %p141 = scmp.ne.s32.totalorder %s132, %s133
      %p142 = scmp.eq.s32.totalorder %s24, 0
      %p143 = por %p141, %p142
      %p144 = scmp.ne.s32.totalorder %s132, %s133
      %p145 = scmp.eq.s32.totalorder %s25, 3
      %p146 = por %p144, %p145
      %p148 = scmp.ne.s32.totalorder %s133, %s147
      %p149 = scmp.eq.s32.totalorder %s25, 0
      %p150 = por %p148, %p149
      %s152 = sadd.s32 %s151, 1
      %p155 = scmp.eq.s32.totalorder %s19, 3
      %p156 = scmp.ne.s32.totalorder %s151, %s153
      %p157 = scmp.eq.s32.totalorder %s19, 0
      %p158 = por %p156, %p157
      %p159 = scmp.ne.s32.totalorder %s151, %s153
      %p160 = scmp.eq.s32.totalorder %s24, 3
      %p161 = por %p159, %p160
      %p162 = scmp.ne.s32.totalorder %s153, %s154
      %p163 = scmp.eq.s32.totalorder %s24, 0
      %p164 = por %p162, %p163
      %p165 = scmp.ne.s32.totalorder %s153, %s154
      %p166 = scmp.eq.s32.totalorder %s25, 3
      %p167 = por %p165, %p166
      %p169 = scmp.ne.s32.totalorder %s154, %s168
      %p170 = scmp.eq.s32.totalorder %s25, 0
      %p171 = por %p169, %p170
      %s173 = sadd.s32 %s172, 1
      %p176 = scmp.eq.s32.totalorder %s19, 3
      %p177 = scmp.ne.s32.totalorder %s172, %s174
      %p178 = scmp.eq.s32.totalorder %s19, 0
      %p179 = por %p177, %p178
      %p180 = scmp.ne.s32.totalorder %s172, %s174
      %p181 = scmp.eq.s32.totalorder %s24, 3
      %p182 = por %p180, %p181
      %p183 = scmp.ne.s32.totalorder %s174, %s175
      %p184 = scmp.eq.s32.totalorder %s24, 0
      %p185 = por %p183, %p184
      %p186 = scmp.ne.s32.totalorder %s174, %s175
      %p187 = scmp.eq.s32.totalorder %s25, 3
      %p188 = por %p186, %p187
      %p190 = scmp.ne.s32.totalorder %s175, %s189
      %p191 = scmp.eq.s32.totalorder %s25, 0
      %p192 = por %p190, %p191
      %s194 = sadd.s32 %s193, 1
      %p197 = scmp.eq.s32.totalorder %s19, 3
      %p198 = scmp.ne.s32.totalorder %s193, %s195
      %p199 = scmp.eq.s32.totalorder %s19, 0
      %p200 = por %p198, %p199
      %p201 = scmp.ne.s32.totalorder %s193, %s195
      %p202 = scmp.eq.s32.totalorder %s24, 3
      %p203 = por %p201, %p202
      %p204 = scmp.ne.s32.totalorder %s195, %s196
      %p205 = scmp.eq.s32.totalorder %s24, 0
      %p206 = por %p204, %p205
      %p207 = scmp.ne.s32.totalorder %s195, %s196
      %p208 = scmp.eq.s32.totalorder %s25, 3
      %p209 = por %p207, %p208
      %p211 = scmp.ne.s32.totalorder %s196, %s210
      %p212 = scmp.eq.s32.totalorder %s25, 0
      %p213 = por %p211, %p212
      %s215 = sadd.s32 %s214, 1
      %p218 = scmp.eq.s32.totalorder %s19, 3
      %p219 = scmp.ne.s32.totalorder %s214, %s216
      %p220 = scmp.eq.s32.totalorder %s19, 0
      %p221 = por %p219, %p220
      %p222 = scmp.ne.s32.totalorder %s214, %s216
      %p223 = scmp.eq.s32.totalorder %s24, 3
      %p224 = por %p222, %p223
      %p225 = scmp.ne.s32.totalorder %s216, %s217
      %p226 = scmp.eq.s32.totalorder %s24, 0
      %p227 = por %p225, %p226
      %p228 = scmp.ne.s32.totalorder %s216, %s217
      %p229 = scmp.eq.s32.totalorder %s25, 3
      %p230 = por %p228, %p229
      %p232 = scmp.ne.s32.totalorder %s217, %s231
      %p233 = scmp.eq.s32.totalorder %s25, 0
      %p234 = por %p232, %p233
      %s236 = sadd.s32 %s235, 1
      %p239 = scmp.eq.s32.totalorder %s19, 3
      %p240 = scmp.ne.s32.totalorder %s235, %s237
      %p241 = scmp.eq.s32.totalorder %s19, 0
      %p242 = por %p240, %p241
      %p243 = scmp.ne.s32.totalorder %s235, %s237
      %p244 = scmp.eq.s32.totalorder %s24, 3
      %p245 = por %p243, %p244
      %p246 = scmp.ne.s32.totalorder %s237, %s238
      %p247 = scmp.eq.s32.totalorder %s24, 0
      %p248 = por %p246, %p247
      %p249 = scmp.ne.s32.totalorder %s237, %s238
      %p250 = scmp.eq.s32.totalorder %s25, 3
      %p251 = por %p249, %p250
      %p253 = scmp.ne.s32.totalorder %s238, %s252
      %p254 = scmp.eq.s32.totalorder %s25, 0
      %p255 = por %p253, %p254
      %s256 = ssub.s32 %s27, %s34
      %s257 = ssub.s32 %s26, %s38
      %s258 = sor.u32 %s256, %s257
      %p259 = scmp.eq.s32.totalorder %s258, 0
      %s261 = sadd.s32 %s260, 1
      %s262 = scalar_select %p259, %s260, %s261
      %p265 = pneg %p259
      %p266 = scmp.eq.s32.totalorder %s19, 3
      %p267 = por %p265, %p266
      %p268 = scmp.ne.s32.totalorder %s260, %s263
      %p269 = scmp.eq.s32.totalorder %s19, 0
      %p270 = por %p268, %p269
      %p271 = scmp.ne.s32.totalorder %s260, %s263
      %p272 = scmp.eq.s32.totalorder %s24, 3
      %p273 = por %p271, %p272
      %p274 = scmp.ne.s32.totalorder %s263, %s264
      %p275 = scmp.eq.s32.totalorder %s24, 0
      %p276 = por %p274, %p275
      %p277 = scmp.ne.s32.totalorder %s263, %s264
      %p278 = scmp.eq.s32.totalorder %s25, 3
      %p279 = por %p277, %p278
      %p281 = scmp.ne.s32.totalorder %s264, %s280
      %p282 = scmp.eq.s32.totalorder %s25, 0
      %p283 = por %p281, %p282
      %p284 = scmp.le.s32.totalorder 1, %s19
      %p285 = scmp.lt.s32.totalorder %s19, 5
      %p286 = pnand %p284, %p285
      %p287 = pneg %p286
      // Predicated region
      $region9: #{ssa_forward.1} parent=5 // pred_check
        _
      $region10: #{ssa_forward.1} parent=5 // pred_check_branch
        %289 = sbr.rel (%p286) target = $region12
      $region11: #{ssa_forward.1} parent=5 // pred_region
        %s290 = ssub.s32 %s19, 1
        // Predicated region
        $region13: #{ssa_forward.1} parent=11 // pred_check
          %p291 = pneg %p80
        $region14: #{ssa_forward.1} parent=11 // pred_check_branch
          %293 = sbr.rel (%p291) target = $region16
        $region15: #{ssa_forward.1} parent=11 // pred_region
          _
        $region16: #{ssa_forward.1} parent=11 // pred_fallthru
          _
        // Predicated region
        $region17: #{ssa_forward.1} parent=11 // pred_check
          %p294 = pneg %p101
        $region18: #{ssa_forward.1} parent=11 // pred_check_branch
          %296 = sbr.rel (%p294) target = $region20
        $region19: #{ssa_forward.1} parent=11 // pred_region
          _
        $region20: #{ssa_forward.1} parent=11 // pred_fallthru
          _
        // Predicated region
        $region21: #{ssa_forward.1} parent=11 // pred_check
          %p297 = pneg %p122
        $region22: #{ssa_forward.1} parent=11 // pred_check_branch
          %299 = sbr.rel (%p297) target = $region24
        $region23: #{ssa_forward.1} parent=11 // pred_region
          _
        $region24: #{ssa_forward.1} parent=11 // pred_fallthru
          _
        // Predicated region
        $region25: #{ssa_forward.1} parent=11 // pred_check
          %p300 = pneg %p143
        $region26: #{ssa_forward.1} parent=11 // pred_check_branch
          %302 = sbr.rel (%p300) target = $region28
        $region27: #{ssa_forward.1} parent=11 // pred_region
          _
        $region28: #{ssa_forward.1} parent=11 // pred_fallthru
          _
        // Predicated region
        $region29: #{ssa_forward.1} parent=11 // pred_check
          %p303 = pneg %p164
        $region30: #{ssa_forward.1} parent=11 // pred_check_branch
          %305 = sbr.rel (%p303) target = $region32
        $region31: #{ssa_forward.1} parent=11 // pred_region
          _
        $region32: #{ssa_forward.1} parent=11 // pred_fallthru
          _
        // Predicated region
        $region33: #{ssa_forward.1} parent=11 // pred_check
          %p306 = pneg %p185
        $region34: #{ssa_forward.1} parent=11 // pred_check_branch
          %308 = sbr.rel (%p306) target = $region36
        $region35: #{ssa_forward.1} parent=11 // pred_region
          _
        $region36: #{ssa_forward.1} parent=11 // pred_fallthru
          _
        // Predicated region
        $region37: #{ssa_forward.1} parent=11 // pred_check
          %p309 = pneg %p206
        $region38: #{ssa_forward.1} parent=11 // pred_check_branch
          %311 = sbr.rel (%p309) target = $region40
        $region39: #{ssa_forward.1} parent=11 // pred_region
          _
        $region40: #{ssa_forward.1} parent=11 // pred_fallthru
          _
        // Predicated region
        $region41: #{ssa_forward.1} parent=11 // pred_check
          %p312 = pneg %p227
        $region42: #{ssa_forward.1} parent=11 // pred_check_branch
          %314 = sbr.rel (%p312) target = $region44
        $region43: #{ssa_forward.1} parent=11 // pred_region
          _
        $region44: #{ssa_forward.1} parent=11 // pred_fallthru
          _
        // Predicated region
        $region45: #{ssa_forward.1} parent=11 // pred_check
          %p315 = pneg %p248
        $region46: #{ssa_forward.1} parent=11 // pred_check_branch
          %317 = sbr.rel (%p315) target = $region48
        $region47: #{ssa_forward.1} parent=11 // pred_region
          _
        $region48: #{ssa_forward.1} parent=11 // pred_fallthru
          _
      $region12: #{ssa_forward.1} parent=5 // pred_fallthru
        _
      %p318 = scmp.lt.s32.totalorder %s19, 4
      // Predicated region
      $region49: #{ssa_forward.1} parent=5 // pred_check
        %p319 = pneg %p318
      $region50: #{ssa_forward.1} parent=5 // pred_check_branch
        %321 = sbr.rel (%p319) target = $region52
      $region51: #{ssa_forward.1} parent=5 // pred_region
        // Predicated region
        $region53: #{ssa_forward.1} parent=51 // pred_check
          %p322 = pneg %p53
        $region54: #{ssa_forward.1} parent=51 // pred_check_branch
          %324 = sbr.rel (%p322) target = $region56
        $region55: #{ssa_forward.1} parent=51 // pred_region
          %s325 = smul.u32 4, %s26
          %p326 = scmp.lt.s32.totalorder %s27, 3
          %s327 = scalar_select %p326, %s27, 3
          %p328 = scmp.lt.s32.totalorder %s325, 3
          %s329 = scalar_select %p328, %s325, 3
          %s330 = smul.addr %s327, 4
          %s331 = sadd.s32 %s329, %s330
          %s332 = smul.addr %s331, 4
          %s333 = scalar_lea.vmem %s0, %s332
          %s334 = smul.u32 4, %s26
        $region56: #{ssa_forward.1} parent=51 // pred_fallthru
          _
      $region52: #{ssa_forward.1} parent=5 // pred_fallthru
        _
      %p335 = scmp.le.s32.totalorder 1, %s19
      %p336 = scmp.lt.s32.totalorder %s19, 5
      %p337 = pnand %p335, %p336
      %p338 = pneg %p337
      // Predicated region
      $region57: #{ssa_forward.1} parent=5 // pred_check
        _
      $region58: #{ssa_forward.1} parent=5 // pred_check_branch
        %340 = sbr.rel (%p337) target = $region60
      $region59: #{ssa_forward.1} parent=5 // pred_region
        %s341 = ssub.s32 %s19, 1
        %s342 = smul.u32 4, %s28
        %p343 = scmp.lt.s32.totalorder %s29, 3
        %s344 = scalar_select %p343, %s29, 3
        %p345 = scmp.lt.s32.totalorder %s342, 3
        %s346 = scalar_select %p345, %s342, 3
        %s347 = smul.addr %s344, 4
        %s348 = sadd.s32 %s346, %s347
        %s349 = smul.addr %s348, 4
        %s350 = scalar_lea.vmem %s0, %s349
        %p351 = pneg %p59
        %p352 = pneg %p56
        %p353 = pneg %p80
        %p354 = pneg %p77
        %p355 = pneg %p101
        %p356 = pneg %p98
        %p357 = pneg %p122
        %p358 = pneg %p119
        %p359 = pneg %p143
        %p360 = pneg %p140
        %p361 = pneg %p164
        %p362 = pneg %p161
        %p363 = pneg %p185
        %p364 = pneg %p182
        %p365 = pneg %p206
        %p366 = pneg %p203
        %p367 = pneg %p227
        %p368 = pneg %p224
        %p369 = pneg %p248
        %p370 = pneg %p245
        %p371 = pneg %p276
        %p372 = pneg %p273
        %s373 = sand.u32 %s263, 1
        %s374 = scalar_lea.sflag [#allocation8], %s373
        %s375 = sand.u32 %s263, 1
        %s376 = smul.addr %s375, 32
        %s377 = scalar_lea.vmem [#allocation7], %s376
        %s378 = smul.u32 4, %s28
        %p379 = scmp.lt.s32.totalorder %s29, 3
        %s380 = scalar_select %p379, %s29, 3
        %p381 = scmp.lt.s32.totalorder %s378, 3
        %s382 = scalar_select %p381, %s378, 3
        %s383 = smul.addr %s380, 4
        %s384 = sadd.s32 %s382, %s383
        %s385 = smul.addr %s384, 4
        %s386 = scalar_lea.vmem %s0, %s385
        %s387 = smul.u32 4, %s28
        %s388 = smul.u32 4, %s28
        %p390 = scmp.eq.s32.totalorder %s29, 0
        // Predicated region
        $region61: #{ssa_forward.1} parent=59 // pred_check
          %p391 = pneg %p390
        $region62: #{ssa_forward.1} parent=59 // pred_check_branch
          %393 = sbr.rel (%p391) target = $region64
        $region63: #{ssa_forward.1} parent=59 // pred_region
          %vm394 = vcmask 261120
          %395 = vst.msk [vmem:[#allocation2] sm:$0xff] %vm394, 0.0
          %396 = vst.msk [vmem:[#allocation2 + $0x8] sm:$0xff] %vm394, 0.0
          %397 = vst.msk [vmem:[#allocation2 + $0x10] sm:$0xff] %vm394, 0.0
          %398 = vst.msk [vmem:[#allocation2 + $0x18] sm:$0xff] %vm394, 0.0
          %399 = vst.msk [vmem:[#allocation3] sm:$0xff] %vm394, 0.0
          %400 = vst.msk [vmem:[#allocation3 + $0x8] sm:$0xff] %vm394, 0.0
          %401 = vst.msk [vmem:[#allocation3 + $0x10] sm:$0xff] %vm394, 0.0
          %402 = vst.msk [vmem:[#allocation3 + $0x18] sm:$0xff] %vm394, 0.0
          %403 = vst.msk [vmem:[#allocation4] sm:$0xff] %vm394, 0.0
          %404 = vst.msk [vmem:[#allocation4 + $0x8] sm:$0xff] %vm394, 0.0
          %405 = vst.msk [vmem:[#allocation4 + $0x10] sm:$0xff] %vm394, 0.0
          %406 = vst.msk [vmem:[#allocation4 + $0x18] sm:$0xff] %vm394, 0.0
          %407 = vst.msk [vmem:[#allocation5] sm:$0xff] %vm394, 0.0
          %408 = vst.msk [vmem:[#allocation5 + $0x8] sm:$0xff] %vm394, 0.0
          %409 = vst.msk [vmem:[#allocation5 + $0x10] sm:$0xff] %vm394, 0.0
          %410 = vst.msk [vmem:[#allocation5 + $0x18] sm:$0xff] %vm394, 0.0
          %411 = vst.msk [vmem:[#allocation6] sm:$0xff] %vm394, 0.0
          %412 = vst.msk [vmem:[#allocation6 + $0x8] sm:$0xff] %vm394, 0.0
          %413 = vst.msk [vmem:[#allocation6 + $0x10] sm:$0xff] %vm394, 0.0
          %414 = vst.msk [vmem:[#allocation6 + $0x18] sm:$0xff] %vm394, 0.0
        $region64: #{ssa_forward.1} parent=59 // pred_fallthru
          _
        %v415 = vld [vmem:[%s386] sm:$0xf]
        %v416 = vld [vmem:[%s386 + $0x4] sm:$0xf]
        %v417 = vld [vmem:[%s386 + $0x8] sm:$0xf]
        %v418 = vld [vmem:[%s386 + $0xc] sm:$0xf]
        %v419 = vld [vmem:[%s1] sm:$0xf]
        %v420 = vld [vmem:[%s1 + $0x4] sm:$0xf]
        %v421 = vld [vmem:[%s1 + $0x8] sm:$0xf]
        %v422 = vld [vmem:[%s1 + $0xc] sm:$0xf]
        %v423 = vld [vmem:[%s5] sm:$0x1]
        %v425 = vlaneseq
        %v426 = vshrl.u32 %v425, 7
        %v427 = vsub.s32 0, %v426
        %v428 = vrot.slane %v423, %v427
        %v434 = vunpack.c.l.b16 %v415
        %v435 = vunpack.c.l.b16 %v416
        %v436 = vunpack.c.l.b16 %v417
        %v437 = vunpack.c.l.b16 %v418
        %v438 = vpack.c.b16 %v435, %v434
        %v439 = vpack.c.b16 %v437, %v436
        %v444 = vunpack.c.l.b16 %v419
        %v445 = vunpack.c.l.b16 %v420
        %v446 = vunpack.c.l.b16 %v421
        %v447 = vunpack.c.l.b16 %v422
        %v448 = vpack.c.b16 %v445, %v444
        %v449 = vpack.c.b16 %v447, %v446
        %vm452 = vcmask 261120
        %v454 = vsel %vm452, %v438, 0
        %v457 = vsel %vm452, %v439, 0
        %459 = vmatprep.subr.bf16.mxu0 0
        %460 = vmatpush1.bf16.msra.mxu0 %v448
        %461 = vmatprep.subr.bf16.mxu0 0
        %462 = vmatpush1.bf16.msra.mxu0 %v449
        %463 = vmatprep.subr.bf16.mxu0 0
        %464 = vmatpush1.bf16.msra.mxu0 0
        %465 = vmatprep.subr.bf16.mxu0 0
        %466 = vmatpush1.bf16.msra.mxu0 0
        %467 = vmatprep.subr.bf16.mxu0 0
        %468 = vmatpush1.bf16.msra.mxu0 0
        %469 = vmatprep.subr.bf16.mxu0 0
        %470 = vmatpush1.bf16.msra.mxu0 0
        %471 = vmatprep.subr.bf16.mxu0 0
        %472 = vmatpush1.bf16.msra.mxu0 0
        %473 = vmatprep.subr.bf16.mxu0 0
        %474 = vmatpush1.bf16.msra.mxu0 0
        %475 = vmatprep.subr.bf16.mxu0 0
        %476 = vmatpush1.bf16.msra.mxu0 0
        %477 = vmatprep.subr.bf16.mxu0 0
        %478 = vmatpush1.bf16.msra.mxu0 0
        %479 = vmatprep.subr.bf16.mxu0 0
        %480 = vmatpush1.bf16.msra.mxu0 0
        %481 = vmatprep.subr.bf16.mxu0 0
        %482 = vmatpush1.bf16.msra.mxu0 0
        %483 = vmatprep.subr.bf16.mxu0 0
        %484 = vmatpush1.bf16.msra.mxu0 0
        %485 = vmatprep.subr.bf16.mxu0 0
        %486 = vmatpush1.bf16.msra.mxu0 0
        %487 = vmatprep.subr.bf16.mxu0 0
        %488 = vmatpush1.bf16.msra.mxu0 0
        %489 = vmatprep.subr.bf16.mxu0 0
        %490 = vmatpush1.bf16.msra.mxu0 0
        %491 = vmatprep.mubr.bf16.mxu0 0
        %492 = vmatmul.mubr.bf16.gmra.mrb[0].mxu0 %v454
        %v493 = vpop.f32.mrb[0].mxu0
        %v494 = vadd.f32 %v428, %v493
        %v495 = vpop.f32.mrb[0].mxu0
        %v496 = vpop.f32.mrb[0].mxu0
        %v497 = vadd.f32 %v428, %v496
        %v498 = vpop.f32.mrb[0].mxu0
        %499 = vmatprep.mubr.bf16.mxu0 0
        %500 = vmatmul.mubr.bf16.gmra.mrb[0].mxu0 %v457
        %v501 = vpop.f32.mrb[0].mxu0
        %v502 = vadd.f32 %v428, %v501
        %v503 = vpop.f32.mrb[0].mxu0
        %v504 = vpop.f32.mrb[0].mxu0
        %v505 = vadd.f32 %v428, %v504
        %v506 = vpop.f32.mrb[0].mxu0
        %507 = vdwg.mxu0
        %v508 = vld [vmem:[%s2] sm:$0xf]
        %v509 = vld [vmem:[%s2 + $0x4] sm:$0xf]
        %v510 = vld [vmem:[%s2 + $0x8] sm:$0xf]
        %v511 = vld [vmem:[%s2 + $0xc] sm:$0xf]
        %v512 = vld [vmem:[%s6] sm:$0x1]
        %v514 = vlaneseq
        %v515 = vshrl.u32 %v514, 7
        %v516 = vsub.s32 0, %v515
        %v517 = vrot.slane %v512, %v516
        %v523 = vunpack.c.l.b16 %v508
        %v524 = vunpack.c.l.b16 %v509
        %v525 = vunpack.c.l.b16 %v510
        %v526 = vunpack.c.l.b16 %v511
        %v527 = vpack.c.b16 %v524, %v523
        %v528 = vpack.c.b16 %v526, %v525
        %531 = vmatprep.subr.bf16.mxu0 0
        %532 = vmatpush1.bf16.msra.mxu0 %v527
        %533 = vmatprep.subr.bf16.mxu0 0
        %534 = vmatpush1.bf16.msra.mxu0 %v528
        %535 = vmatprep.subr.bf16.mxu0 0
        %536 = vmatpush1.bf16.msra.mxu0 0
        %537 = vmatprep.subr.bf16.mxu0 0
        %538 = vmatpush1.bf16.msra.mxu0 0
        %539 = vmatprep.subr.bf16.mxu0 0
        %540 = vmatpush1.bf16.msra.mxu0 0
        %541 = vmatprep.subr.bf16.mxu0 0
        %542 = vmatpush1.bf16.msra.mxu0 0
        %543 = vmatprep.subr.bf16.mxu0 0
        %544 = vmatpush1.bf16.msra.mxu0 0
        %545 = vmatprep.subr.bf16.mxu0 0
        %546 = vmatpush1.bf16.msra.mxu0 0
        %547 = vmatprep.subr.bf16.mxu0 0
        %548 = vmatpush1.bf16.msra.mxu0 0
        %549 = vmatprep.subr.bf16.mxu0 0
        %550 = vmatpush1.bf16.msra.mxu0 0
        %551 = vmatprep.subr.bf16.mxu0 0
        %552 = vmatpush1.bf16.msra.mxu0 0
        %553 = vmatprep.subr.bf16.mxu0 0
        %554 = vmatpush1.bf16.msra.mxu0 0
        %555 = vmatprep.subr.bf16.mxu0 0
        %556 = vmatpush1.bf16.msra.mxu0 0
        %557 = vmatprep.subr.bf16.mxu0 0
        %558 = vmatpush1.bf16.msra.mxu0 0
        %559 = vmatprep.subr.bf16.mxu0 0
        %560 = vmatpush1.bf16.msra.mxu0 0
        %561 = vmatprep.subr.bf16.mxu0 0
        %562 = vmatpush1.bf16.msra.mxu0 0
        %563 = vmatprep.mubr.bf16.mxu0 0
        %564 = vmatmul.mubr.bf16.gmra.mrb[0].mxu0 %v454
        %v565 = vpop.f32.mrb[0].mxu0
        %v566 = vadd.f32 %v517, %v565
        %v567 = vpop.f32.mrb[0].mxu0
        %v568 = vpop.f32.mrb[0].mxu0
        %v569 = vadd.f32 %v517, %v568
        %v570 = vpop.f32.mrb[0].mxu0
        %571 = vmatprep.mubr.bf16.mxu0 0
        %572 = vmatmul.mubr.bf16.gmra.mrb[0].mxu0 %v457
        %v573 = vpop.f32.mrb[0].mxu0
        %v574 = vadd.f32 %v517, %v573
        %v575 = vpop.f32.mrb[0].mxu0
        %v576 = vpop.f32.mrb[0].mxu0
        %v577 = vadd.f32 %v517, %v576
        %v578 = vpop.f32.mrb[0].mxu0
        %579 = vdwg.mxu0
        %v580 = vld [vmem:[%s3] sm:$0xf]
        %v581 = vld [vmem:[%s3 + $0x4] sm:$0xf]
        %v582 = vld [vmem:[%s3 + $0x8] sm:$0xf]
        %v583 = vld [vmem:[%s3 + $0xc] sm:$0xf]
        %v584 = vld [vmem:[%s7] sm:$0x1]
        %v586 = vlaneseq
        %v587 = vshrl.u32 %v586, 7
        %v588 = vsub.s32 0, %v587
        %v589 = vrot.slane %v584, %v588
        %v595 = vunpack.c.l.b16 %v580
        %v596 = vunpack.c.l.b16 %v581
        %v597 = vunpack.c.l.b16 %v582
        %v598 = vunpack.c.l.b16 %v583
        %v599 = vpack.c.b16 %v596, %v595
        %v600 = vpack.c.b16 %v598, %v597
        %603 = vmatprep.subr.bf16.mxu0 0
        %604 = vmatpush1.bf16.msra.mxu0 %v599
        %605 = vmatprep.subr.bf16.mxu0 0
        %606 = vmatpush1.bf16.msra.mxu0 %v600
        %607 = vmatprep.subr.bf16.mxu0 0
        %608 = vmatpush1.bf16.msra.mxu0 0
        %609 = vmatprep.subr.bf16.mxu0 0
        %610 = vmatpush1.bf16.msra.mxu0 0
        %611 = vmatprep.subr.bf16.mxu0 0
        %612 = vmatpush1.bf16.msra.mxu0 0
        %613 = vmatprep.subr.bf16.mxu0 0
        %614 = vmatpush1.bf16.msra.mxu0 0
        %615 = vmatprep.subr.bf16.mxu0 0
        %616 = vmatpush1.bf16.msra.mxu0 0
        %617 = vmatprep.subr.bf16.mxu0 0
        %618 = vmatpush1.bf16.msra.mxu0 0
        %619 = vmatprep.subr.bf16.mxu0 0
        %620 = vmatpush1.bf16.msra.mxu0 0
        %621 = vmatprep.subr.bf16.mxu0 0
        %622 = vmatpush1.bf16.msra.mxu0 0
        %623 = vmatprep.subr.bf16.mxu0 0
        %624 = vmatpush1.bf16.msra.mxu0 0
        %625 = vmatprep.subr.bf16.mxu0 0
        %626 = vmatpush1.bf16.msra.mxu0 0
        %627 = vmatprep.subr.bf16.mxu0 0
        %628 = vmatpush1.bf16.msra.mxu0 0
        %629 = vmatprep.subr.bf16.mxu0 0
        %630 = vmatpush1.bf16.msra.mxu0 0
        %631 = vmatprep.subr.bf16.mxu0 0
        %632 = vmatpush1.bf16.msra.mxu0 0
        %633 = vmatprep.subr.bf16.mxu0 0
        %634 = vmatpush1.bf16.msra.mxu0 0
        %635 = vmatprep.mubr.bf16.mxu0 0
        %636 = vmatmul.mubr.bf16.gmra.mrb[0].mxu0 %v454
        %v637 = vpop.f32.mrb[0].mxu0
        %v638 = vadd.f32 %v589, %v637
        %v639 = vpop.f32.mrb[0].mxu0
        %v640 = vpop.f32.mrb[0].mxu0
        %v641 = vadd.f32 %v589, %v640
        %v642 = vpop.f32.mrb[0].mxu0
        %643 = vmatprep.mubr.bf16.mxu0 0
        %644 = vmatmul.mubr.bf16.gmra.mrb[0].mxu0 %v457
        %v645 = vpop.f32.mrb[0].mxu0
        %v646 = vadd.f32 %v589, %v645
        %v647 = vpop.f32.mrb[0].mxu0
        %v648 = vpop.f32.mrb[0].mxu0
        %v649 = vadd.f32 %v589, %v648
        %v650 = vpop.f32.mrb[0].mxu0
        %651 = vdwg.mxu0
        %v652 = vld [vmem:[#allocation2] sm:$0xff]
        %v653 = vld [vmem:[#allocation2 + $0x8] sm:$0xff]
        %v654 = vld [vmem:[#allocation2 + $0x10] sm:$0xff]
        %v655 = vld [vmem:[#allocation2 + $0x18] sm:$0xff]
        %v656 = vsub.f32 %v494, %v652
        %v657 = vsub.f32 %v497, %v653
        %v658 = vsub.f32 %v502, %v654
        %v659 = vsub.f32 %v505, %v655
        %v660 = vmul.f32 %v656, 0.5
        %v661 = vmul.f32 %v657, 0.5
        %v662 = vmul.f32 %v658, 0.5
        %v663 = vmul.f32 %v659, 0.5
        %v664 = vadd.f32 %v652, %v660
        %v665 = vadd.f32 %v653, %v661
        %v666 = vadd.f32 %v654, %v662
        %v667 = vadd.f32 %v655, %v663
        %vm668 = vcmp.ge.f32.partialorder %v664, 1.0
        %vm669 = vcmp.ge.f32.partialorder %v665, 1.0
        %vm670 = vcmp.ge.f32.partialorder %v666, 1.0
        %vm671 = vcmp.ge.f32.partialorder %v667, 1.0
        %v672 = vsel %vm668, 0.0, %v664
        %v673 = vsel %vm669, 0.0, %v665
        %v674 = vsel %vm670, 0.0, %v666
        %v675 = vsel %vm671, 0.0, %v667
        %676 = vst.msk [vmem:[#allocation2] sm:$0xff] %vm452, %v672
        %677 = vst.msk [vmem:[#allocation2 + $0x8] sm:$0xff] %vm452, %v673
        %678 = vst.msk [vmem:[#allocation2 + $0x10] sm:$0xff] %vm452, %v674
        %679 = vst.msk [vmem:[#allocation2 + $0x18] sm:$0xff] %vm452, %v675
        %v680 = vsel %vm668, 1, 0
        %v681 = vsel %vm669, 1, 0
        %v682 = vsel %vm670, 1, 0
        %v683 = vsel %vm671, 1, 0
        %v684 = vcvt.s32.f32 %v680
        %v685 = vcvt.s32.f32 %v681
        %v686 = vcvt.s32.f32 %v682
        %v687 = vcvt.s32.f32 %v683
        %v688 = vpack.c.bf16 %v685, %v684
        %v689 = vpack.c.bf16 %v687, %v686
        %v690 = vld [vmem:[#allocation3] sm:$0xff]
        %v691 = vld [vmem:[#allocation3 + $0x8] sm:$0xff]
        %v692 = vld [vmem:[#allocation3 + $0x10] sm:$0xff]
        %v693 = vld [vmem:[#allocation3 + $0x18] sm:$0xff]
        %v694 = vsub.f32 %v566, %v690
        %v695 = vsub.f32 %v569, %v691
        %v696 = vsub.f32 %v574, %v692
        %v697 = vsub.f32 %v577, %v693
        %v698 = vmul.f32 %v694, 0.5
        %v699 = vmul.f32 %v695, 0.5
        %v700 = vmul.f32 %v696, 0.5
        %v701 = vmul.f32 %v697, 0.5
        %v702 = vadd.f32 %v690, %v698
        %v703 = vadd.f32 %v691, %v699
        %v704 = vadd.f32 %v692, %v700
        %v705 = vadd.f32 %v693, %v701
        %vm706 = vcmp.ge.f32.partialorder %v702, 1.0
        %vm707 = vcmp.ge.f32.partialorder %v703, 1.0
        %vm708 = vcmp.ge.f32.partialorder %v704, 1.0
        %vm709 = vcmp.ge.f32.partialorder %v705, 1.0
        %v710 = vsel %vm706, 0.0, %v702
        %v711 = vsel %vm707, 0.0, %v703
        %v712 = vsel %vm708, 0.0, %v704
        %v713 = vsel %vm709, 0.0, %v705
        %714 = vst.msk [vmem:[#allocation3] sm:$0xff] %vm452, %v710
        %715 = vst.msk [vmem:[#allocation3 + $0x8] sm:$0xff] %vm452, %v711
        %716 = vst.msk [vmem:[#allocation3 + $0x10] sm:$0xff] %vm452, %v712
        %717 = vst.msk [vmem:[#allocation3 + $0x18] sm:$0xff] %vm452, %v713
        %v718 = vsel %vm706, 1, 0
        %v719 = vsel %vm707, 1, 0
        %v720 = vsel %vm708, 1, 0
        %v721 = vsel %vm709, 1, 0
        %v722 = vcvt.s32.f32 %v718
        %v723 = vcvt.s32.f32 %v719
        %v724 = vcvt.s32.f32 %v720
        %v725 = vcvt.s32.f32 %v721
        %v726 = vpack.c.bf16 %v723, %v722
        %v727 = vpack.c.bf16 %v725, %v724
        %v728 = vld [vmem:[#allocation4] sm:$0xff]
        %v729 = vld [vmem:[#allocation4 + $0x8] sm:$0xff]
        %v730 = vld [vmem:[#allocation4 + $0x10] sm:$0xff]
        %v731 = vld [vmem:[#allocation4 + $0x18] sm:$0xff]
        %v732 = vsub.f32 %v638, %v728
        %v733 = vsub.f32 %v641, %v729
        %v734 = vsub.f32 %v646, %v730
        %v735 = vsub.f32 %v649, %v731
        %v736 = vmul.f32 %v732, 0.5
        %v737 = vmul.f32 %v733, 0.5
        %v738 = vmul.f32 %v734, 0.5
        %v739 = vmul.f32 %v735, 0.5
        %v740 = vadd.f32 %v728, %v736
        %v741 = vadd.f32 %v729, %v737
        %v742 = vadd.f32 %v730, %v738
        %v743 = vadd.f32 %v731, %v739
        %vm744 = vcmp.ge.f32.partialorder %v740, 1.0
        %vm745 = vcmp.ge.f32.partialorder %v741, 1.0
        %vm746 = vcmp.ge.f32.partialorder %v742, 1.0
        %vm747 = vcmp.ge.f32.partialorder %v743, 1.0
        %v748 = vsel %vm744, 0.0, %v740
        %v749 = vsel %vm745, 0.0, %v741
        %v750 = vsel %vm746, 0.0, %v742
        %v751 = vsel %vm747, 0.0, %v743
        %752 = vst.msk [vmem:[#allocation4] sm:$0xff] %vm452, %v748
        %753 = vst.msk [vmem:[#allocation4 + $0x8] sm:$0xff] %vm452, %v749
        %754 = vst.msk [vmem:[#allocation4 + $0x10] sm:$0xff] %vm452, %v750
        %755 = vst.msk [vmem:[#allocation4 + $0x18] sm:$0xff] %vm452, %v751
        %v756 = vsel %vm744, 1, 0
        %v757 = vsel %vm745, 1, 0
        %v758 = vsel %vm746, 1, 0
        %v759 = vsel %vm747, 1, 0
        %v760 = vcvt.s32.f32 %v756
        %v761 = vcvt.s32.f32 %v757
        %v762 = vcvt.s32.f32 %v758
        %v763 = vcvt.s32.f32 %v759
        %v764 = vpack.c.bf16 %v761, %v760
        %v765 = vpack.c.bf16 %v763, %v762
        %v766 = vld [vmem:[%s9] sm:$0xf]
        %v767 = vld [vmem:[%s9 + $0x4] sm:$0xf]
        %v768 = vld [vmem:[%s9 + $0x8] sm:$0xf]
        %v769 = vld [vmem:[%s9 + $0xc] sm:$0xf]
        %v770 = vld [vmem:[%s9 + $0x10] sm:$0xf]
        %v771 = vld [vmem:[%s9 + $0x14] sm:$0xf]
        %v772 = vld [vmem:[%s9 + $0x18] sm:$0xf]
        %v773 = vld [vmem:[%s9 + $0x1c] sm:$0xf]
        %v774 = vld [vmem:[%s9 + $0x20] sm:$0xf]
        %v775 = vld [vmem:[%s9 + $0x24] sm:$0xf]
        %v776 = vld [vmem:[%s9 + $0x28] sm:$0xf]
        %v777 = vld [vmem:[%s9 + $0x2c] sm:$0xf]
        %v778 = vld [vmem:[%s9 + $0x30] sm:$0xf]
        %v779 = vld [vmem:[%s9 + $0x34] sm:$0xf]
        %v780 = vld [vmem:[%s9 + $0x38] sm:$0xf]
        %v781 = vld [vmem:[%s9 + $0x3c] sm:$0xf]
        %v798 = vunpack.c.l.b16 %v766
        %v799 = vunpack.c.l.b16 %v767
        %v800 = vunpack.c.l.b16 %v768
        %v801 = vunpack.c.l.b16 %v769
        %v802 = vunpack.c.l.b16 %v770
        %v803 = vunpack.c.l.b16 %v771
        %v804 = vunpack.c.l.b16 %v772
        %v805 = vunpack.c.l.b16 %v773
        %v806 = vunpack.c.l.b16 %v774
        %v807 = vunpack.c.l.b16 %v775
        %v808 = vunpack.c.l.b16 %v776
        %v809 = vunpack.c.l.b16 %v777
        %v810 = vunpack.c.l.b16 %v778
        %v811 = vunpack.c.l.b16 %v779
        %v812 = vunpack.c.l.b16 %v780
        %v813 = vunpack.c.l.b16 %v781
        %v814 = vpack.c.b16 %v799, %v798
        %v815 = vpack.c.b16 %v801, %v800
        %v816 = vpack.c.b16 %v803, %v802
        %v817 = vpack.c.b16 %v805, %v804
        %v818 = vpack.c.b16 %v807, %v806
        %v819 = vpack.c.b16 %v809, %v808
        %v820 = vpack.c.b16 %v811, %v810
        %v821 = vpack.c.b16 %v813, %v812
        %v830 = vmul.bf16 %v726, %v814
        %v831 = vmul.bf16 %v726, %v815
        %v832 = vmul.bf16 %v726, %v816
        %v833 = vmul.bf16 %v726, %v817
        %v834 = vmul.bf16 %v726, %v818
        %v835 = vmul.bf16 %v726, %v819
        %v836 = vmul.bf16 %v726, %v820
        %v837 = vmul.bf16 %v726, %v821
        %v838 = vmul.bf16 %v764, %v814
        %v839 = vmul.bf16 %v764, %v815
        %v840 = vmul.bf16 %v764, %v816
        %v841 = vmul.bf16 %v764, %v817
        %v842 = vmul.bf16 %v764, %v818
        %v843 = vmul.bf16 %v764, %v819
        %v844 = vmul.bf16 %v764, %v820
        %v845 = vmul.bf16 %v764, %v821
        %v847 = vsel %vm452, %v688, 0
        %v850 = vsel %vm452, %v830, 0
        %v853 = vsel %vm452, %v831, 0
        %v856 = vsel %vm452, %v832, 0
        %v859 = vsel %vm452, %v833, 0
        %v862 = vsel %vm452, %v834, 0
        %v865 = vsel %vm452, %v835, 0
        %v868 = vsel %vm452, %v836, 0
        %v871 = vsel %vm452, %v837, 0
        %873 = vmatprep.subr.bf16.mxu0 0
        %874 = vmatpush1.bf16.xpose.msra.mxu0 %v850
        %875 = vmatprep.subr.bf16.mxu0 0
        %876 = vmatpush1.bf16.xpose.msra.mxu0 %v853
        %877 = vmatprep.subr.bf16.mxu0 0
        %878 = vmatpush1.bf16.xpose.msra.mxu0 %v856
        %879 = vmatprep.subr.bf16.mxu0 0
        %880 = vmatpush1.bf16.xpose.msra.mxu0 %v859
        %881 = vmatprep.subr.bf16.mxu0 0
        %882 = vmatpush1.bf16.xpose.msra.mxu0 %v862
        %883 = vmatprep.subr.bf16.mxu0 0
        %884 = vmatpush1.bf16.xpose.msra.mxu0 %v865
        %885 = vmatprep.subr.bf16.mxu0 0
        %886 = vmatpush1.bf16.xpose.msra.mxu0 %v868
        %887 = vmatprep.subr.bf16.mxu0 0
        %888 = vmatpush1.bf16.xpose.msra.mxu0 %v871
        %889 = vmatprep.subr.bf16.mxu0 0
        %890 = vmatpush1.bf16.xpose.msra.mxu0 0
        %891 = vmatprep.subr.bf16.mxu0 0
        %892 = vmatpush1.bf16.xpose.msra.mxu0 0
        %893 = vmatprep.subr.bf16.mxu0 0
        %894 = vmatpush1.bf16.xpose.msra.mxu0 0
        %895 = vmatprep.subr.bf16.mxu0 0
        %896 = vmatpush1.bf16.xpose.msra.mxu0 0
        %897 = vmatprep.subr.bf16.mxu0 0
        %898 = vmatpush1.bf16.xpose.msra.mxu0 0
        %899 = vmatprep.subr.bf16.mxu0 0
        %900 = vmatpush1.bf16.xpose.msra.mxu0 0
        %901 = vmatprep.subr.bf16.mxu0 0
        %902 = vmatpush1.bf16.xpose.msra.mxu0 0
        %903 = vmatprep.subr.bf16.mxu0 0
        %904 = vmatpush1.bf16.xpose.msra.mxu0 0
        %905 = vmatprep.mubr.bf16.mxu0 0
        %906 = vmatmul.mubr.bf16.gmra.mrb[0].mxu0 %v847
        %v907 = vpop.f32.mrb[0].mxu0
        %v908 = vadd.f32 0.0, %v907
        %v909 = vpop.f32.mrb[0].mxu0
        %v910 = vpop.f32.mrb[0].mxu0
        %v911 = vadd.f32 0.0, %v910
        %v912 = vpop.f32.mrb[0].mxu0
        %913 = vdwg.mxu0
        %v914 = vpack.c.bf16 %v911, %v908
        %915 = vmatprep.subr.bf16.mxu0 0
        %916 = vmatpush1.bf16.msra.mxu0 %v838
        %917 = vmatprep.subr.bf16.mxu0 0
        %918 = vmatpush1.bf16.msra.mxu0 %v839
        %919 = vmatprep.subr.bf16.mxu0 0
        %920 = vmatpush1.bf16.msra.mxu0 %v840
        %921 = vmatprep.subr.bf16.mxu0 0
        %922 = vmatpush1.bf16.msra.mxu0 %v841
        %923 = vmatprep.subr.bf16.mxu0 0
        %924 = vmatpush1.bf16.msra.mxu0 %v842
        %925 = vmatprep.subr.bf16.mxu0 0
        %926 = vmatpush1.bf16.msra.mxu0 %v843
        %927 = vmatprep.subr.bf16.mxu0 0
        %928 = vmatpush1.bf16.msra.mxu0 %v844
        %929 = vmatprep.subr.bf16.mxu0 0
        %930 = vmatpush1.bf16.msra.mxu0 %v845
        %931 = vmatprep.subr.bf16.mxu0 0
        %932 = vmatpush1.bf16.msra.mxu0 0
        %933 = vmatprep.subr.bf16.mxu0 0
        %934 = vmatpush1.bf16.msra.mxu0 0
        %935 = vmatprep.subr.bf16.mxu0 0
        %936 = vmatpush1.bf16.msra.mxu0 0
        %937 = vmatprep.subr.bf16.mxu0 0
        %938 = vmatpush1.bf16.msra.mxu0 0
        %939 = vmatprep.subr.bf16.mxu0 0
        %940 = vmatpush1.bf16.msra.mxu0 0
        %941 = vmatprep.subr.bf16.mxu0 0
        %942 = vmatpush1.bf16.msra.mxu0 0
        %943 = vmatprep.subr.bf16.mxu0 0
        %944 = vmatpush1.bf16.msra.mxu0 0
        %945 = vmatprep.subr.bf16.mxu0 0
        %946 = vmatpush1.bf16.msra.mxu0 0
        %947 = vmatprep.mubr.bf16.mxu0 0
        %948 = vmatmul.mubr.bf16.gmra.mrb[0].mxu0 %v914
        %v949 = vpop.f32.mrb[0].mxu0
        %v950 = vadd.f32 0.0, %v949
        %v951 = vpop.f32.mrb[0].mxu0
        %v952 = vpop.f32.mrb[0].mxu0
        %v953 = vadd.f32 0.0, %v952
        %v954 = vpop.f32.mrb[0].mxu0
        %955 = vdwg.mxu0
        %v956 = vmul.f32 %v950, 0.25
        %v957 = vmul.f32 %v953, 0.25
        %v958 = vmul.bf16 %v727, %v814
        %v959 = vmul.bf16 %v727, %v815
        %v960 = vmul.bf16 %v727, %v816
        %v961 = vmul.bf16 %v727, %v817
        %v962 = vmul.bf16 %v727, %v818
        %v963 = vmul.bf16 %v727, %v819
        %v964 = vmul.bf16 %v727, %v820
        %v965 = vmul.bf16 %v727, %v821
        %v966 = vmul.bf16 %v765, %v814
        %v967 = vmul.bf16 %v765, %v815
        %v968 = vmul.bf16 %v765, %v816
        %v969 = vmul.bf16 %v765, %v817
        %v970 = vmul.bf16 %v765, %v818
        %v971 = vmul.bf16 %v765, %v819
        %v972 = vmul.bf16 %v765, %v820
        %v973 = vmul.bf16 %v765, %v821
        %v975 = vsel %vm452, %v689, 0
        %v978 = vsel %vm452, %v958, 0
        %v981 = vsel %vm452, %v959, 0
        %v984 = vsel %vm452, %v960, 0
        %v987 = vsel %vm452, %v961, 0
        %v990 = vsel %vm452, %v962, 0
        %v993 = vsel %vm452, %v963, 0
        %v996 = vsel %vm452, %v964, 0
        %v999 = vsel %vm452, %v965, 0
        %1001 = vmatprep.subr.bf16.mxu0 0
        %1002 = vmatpush1.bf16.xpose.msra.mxu0 %v978
        %1003 = vmatprep.subr.bf16.mxu0 0
        %1004 = vmatpush1.bf16.xpose.msra.mxu0 %v981
        %1005 = vmatprep.subr.bf16.mxu0 0
        %1006 = vmatpush1.bf16.xpose.msra.mxu0 %v984
        %1007 = vmatprep.subr.bf16.mxu0 0
        %1008 = vmatpush1.bf16.xpose.msra.mxu0 %v987
        %1009 = vmatprep.subr.bf16.mxu0 0
        %1010 = vmatpush1.bf16.xpose.msra.mxu0 %v990
        %1011 = vmatprep.subr.bf16.mxu0 0
        %1012 = vmatpush1.bf16.xpose.msra.mxu0 %v993
        %1013 = vmatprep.subr.bf16.mxu0 0
        %1014 = vmatpush1.bf16.xpose.msra.mxu0 %v996
        %1015 = vmatprep.subr.bf16.mxu0 0
        %1016 = vmatpush1.bf16.xpose.msra.mxu0 %v999
        %1017 = vmatprep.subr.bf16.mxu0 0
        %1018 = vmatpush1.bf16.xpose.msra.mxu0 0
        %1019 = vmatprep.subr.bf16.mxu0 0
        %1020 = vmatpush1.bf16.xpose.msra.mxu0 0
        %1021 = vmatprep.subr.bf16.mxu0 0
        %1022 = vmatpush1.bf16.xpose.msra.mxu0 0
        %1023 = vmatprep.subr.bf16.mxu0 0
        %1024 = vmatpush1.bf16.xpose.msra.mxu0 0
        %1025 = vmatprep.subr.bf16.mxu0 0
        %1026 = vmatpush1.bf16.xpose.msra.mxu0 0
        %1027 = vmatprep.subr.bf16.mxu0 0
        %1028 = vmatpush1.bf16.xpose.msra.mxu0 0
        %1029 = vmatprep.subr.bf16.mxu0 0
        %1030 = vmatpush1.bf16.xpose.msra.mxu0 0
        %1031 = vmatprep.subr.bf16.mxu0 0
        %1032 = vmatpush1.bf16.xpose.msra.mxu0 0
        %1033 = vmatprep.mubr.bf16.mxu0 0
        %1034 = vmatmul.mubr.bf16.gmra.mrb[0].mxu0 %v975
        %v1035 = vpop.f32.mrb[0].mxu0
        %v1036 = vadd.f32 0.0, %v1035
        %v1037 = vpop.f32.mrb[0].mxu0
        %v1038 = vpop.f32.mrb[0].mxu0
        %v1039 = vadd.f32 0.0, %v1038
        %v1040 = vpop.f32.mrb[0].mxu0
        %1041 = vdwg.mxu0
        %v1042 = vpack.c.bf16 %v1039, %v1036
        %1043 = vmatprep.subr.bf16.mxu0 0
        %1044 = vmatpush1.bf16.msra.mxu0 %v966
        %1045 = vmatprep.subr.bf16.mxu0 0
        %1046 = vmatpush1.bf16.msra.mxu0 %v967
        %1047 = vmatprep.subr.bf16.mxu0 0
        %1048 = vmatpush1.bf16.msra.mxu0 %v968
        %1049 = vmatprep.subr.bf16.mxu0 0
        %1050 = vmatpush1.bf16.msra.mxu0 %v969
        %1051 = vmatprep.subr.bf16.mxu0 0
        %1052 = vmatpush1.bf16.msra.mxu0 %v970
        %1053 = vmatprep.subr.bf16.mxu0 0
        %1054 = vmatpush1.bf16.msra.mxu0 %v971
        %1055 = vmatprep.subr.bf16.mxu0 0
        %1056 = vmatpush1.bf16.msra.mxu0 %v972
        %1057 = vmatprep.subr.bf16.mxu0 0
        %1058 = vmatpush1.bf16.msra.mxu0 %v973
        %1059 = vmatprep.subr.bf16.mxu0 0
        %1060 = vmatpush1.bf16.msra.mxu0 0
        %1061 = vmatprep.subr.bf16.mxu0 0
        %1062 = vmatpush1.bf16.msra.mxu0 0
        %1063 = vmatprep.subr.bf16.mxu0 0
        %1064 = vmatpush1.bf16.msra.mxu0 0
        %1065 = vmatprep.subr.bf16.mxu0 0
        %1066 = vmatpush1.bf16.msra.mxu0 0
        %1067 = vmatprep.subr.bf16.mxu0 0
        %1068 = vmatpush1.bf16.msra.mxu0 0
        %1069 = vmatprep.subr.bf16.mxu0 0
        %1070 = vmatpush1.bf16.msra.mxu0 0
        %1071 = vmatprep.subr.bf16.mxu0 0
        %1072 = vmatpush1.bf16.msra.mxu0 0
        %1073 = vmatprep.subr.bf16.mxu0 0
        %1074 = vmatpush1.bf16.msra.mxu0 0
        %1075 = vmatprep.mubr.bf16.mxu0 0
        %1076 = vmatmul.mubr.bf16.gmra.mrb[0].mxu0 %v1042
        %v1077 = vpop.f32.mrb[0].mxu0
        %v1078 = vadd.f32 0.0, %v1077
        %v1079 = vpop.f32.mrb[0].mxu0
        %v1080 = vpop.f32.mrb[0].mxu0
        %v1081 = vadd.f32 0.0, %v1080
        %v1082 = vpop.f32.mrb[0].mxu0
        %1083 = vdwg.mxu0
        %v1084 = vmul.f32 %v1078, 0.25
        %v1085 = vmul.f32 %v1081, 0.25
        %v1086 = vld [vmem:[#allocation5] sm:$0xff]
        %v1087 = vld [vmem:[#allocation5 + $0x8] sm:$0xff]
        %v1088 = vld [vmem:[#allocation5 + $0x10] sm:$0xff]
        %v1089 = vld [vmem:[#allocation5 + $0x18] sm:$0xff]
        %v1090 = vsub.f32 %v956, %v1086
        %v1091 = vsub.f32 %v957, %v1087
        %v1092 = vsub.f32 %v1084, %v1088
        %v1093 = vsub.f32 %v1085, %v1089
        %v1094 = vmul.f32 %v1090, 0.5
        %v1095 = vmul.f32 %v1091, 0.5
        %v1096 = vmul.f32 %v1092, 0.5
        %v1097 = vmul.f32 %v1093, 0.5
        %v1098 = vadd.f32 %v1086, %v1094
        %v1099 = vadd.f32 %v1087, %v1095
        %v1100 = vadd.f32 %v1088, %v1096
        %v1101 = vadd.f32 %v1089, %v1097
        %vm1102 = vcmp.ge.f32.partialorder %v1098, 0.5
        %vm1103 = vcmp.ge.f32.partialorder %v1099, 0.5
        %vm1104 = vcmp.ge.f32.partialorder %v1100, 0.5
        %vm1105 = vcmp.ge.f32.partialorder %v1101, 0.5
        %v1106 = vsel %vm1102, 0.0, %v1098
        %v1107 = vsel %vm1103, 0.0, %v1099
        %v1108 = vsel %vm1104, 0.0, %v1100
        %v1109 = vsel %vm1105, 0.0, %v1101
        %1110 = vst.msk [vmem:[#allocation5] sm:$0xff] %vm452, %v1106
        %1111 = vst.msk [vmem:[#allocation5 + $0x8] sm:$0xff] %vm452, %v1107
        %1112 = vst.msk [vmem:[#allocation5 + $0x10] sm:$0xff] %vm452, %v1108
        %1113 = vst.msk [vmem:[#allocation5 + $0x18] sm:$0xff] %vm452, %v1109
        %v1114 = vsel %vm1102, 1, 0
        %v1115 = vsel %vm1103, 1, 0
        %v1116 = vsel %vm1104, 1, 0
        %v1117 = vsel %vm1105, 1, 0
        %v1118 = vcvt.s32.f32 %v1114
        %v1119 = vcvt.s32.f32 %v1115
        %v1120 = vcvt.s32.f32 %v1116
        %v1121 = vcvt.s32.f32 %v1117
        %v1122 = vpack.c.bf16 %v1119, %v1118
        %v1123 = vpack.c.bf16 %v1121, %v1120
        %v1124 = vld [vmem:[%s4] sm:$0xf]
        %v1125 = vld [vmem:[%s4 + $0x4] sm:$0xf]
        %v1126 = vld [vmem:[%s4 + $0x8] sm:$0xf]
        %v1127 = vld [vmem:[%s4 + $0xc] sm:$0xf]
        %v1128 = vld [vmem:[%s8] sm:$0x1]
        %v1130 = vlaneseq
        %v1131 = vshrl.u32 %v1130, 7
        %v1132 = vsub.s32 0, %v1131
        %v1133 = vrot.slane %v1128, %v1132
        %v1139 = vunpack.c.l.b16 %v1124
        %v1140 = vunpack.c.l.b16 %v1125
        %v1141 = vunpack.c.l.b16 %v1126
        %v1142 = vunpack.c.l.b16 %v1127
        %v1143 = vpack.c.b16 %v1140, %v1139
        %v1144 = vpack.c.b16 %v1142, %v1141
        %v1148 = vsel %vm452, %v1122, 0
        %v1151 = vsel %vm452, %v1123, 0
        %1153 = vmatprep.subr.bf16.mxu0 0
        %1154 = vmatpush1.bf16.msra.mxu0 %v1143
        %1155 = vmatprep.subr.bf16.mxu0 0
        %1156 = vmatpush1.bf16.msra.mxu0 %v1144
        %1157 = vmatprep.subr.bf16.mxu0 0
        %1158 = vmatpush1.bf16.msra.mxu0 0
        %1159 = vmatprep.subr.bf16.mxu0 0
        %1160 = vmatpush1.bf16.msra.mxu0 0
        %1161 = vmatprep.subr.bf16.mxu0 0
        %1162 = vmatpush1.bf16.msra.mxu0 0
        %1163 = vmatprep.subr.bf16.mxu0 0
        %1164 = vmatpush1.bf16.msra.mxu0 0
        %1165 = vmatprep.subr.bf16.mxu0 0
        %1166 = vmatpush1.bf16.msra.mxu0 0
        %1167 = vmatprep.subr.bf16.mxu0 0
        %1168 = vmatpush1.bf16.msra.mxu0 0
        %1169 = vmatprep.subr.bf16.mxu0 0
        %1170 = vmatpush1.bf16.msra.mxu0 0
        %1171 = vmatprep.subr.bf16.mxu0 0
        %1172 = vmatpush1.bf16.msra.mxu0 0
        %1173 = vmatprep.subr.bf16.mxu0 0
        %1174 = vmatpush1.bf16.msra.mxu0 0
        %1175 = vmatprep.subr.bf16.mxu0 0
        %1176 = vmatpush1.bf16.msra.mxu0 0
        %1177 = vmatprep.subr.bf16.mxu0 0
        %1178 = vmatpush1.bf16.msra.mxu0 0
        %1179 = vmatprep.subr.bf16.mxu0 0
        %1180 = vmatpush1.bf16.msra.mxu0 0
        %1181 = vmatprep.subr.bf16.mxu0 0
        %1182 = vmatpush1.bf16.msra.mxu0 0
        %1183 = vmatprep.subr.bf16.mxu0 0
        %1184 = vmatpush1.bf16.msra.mxu0 0
        %1185 = vmatprep.mubr.bf16.mxu0 0
        %1186 = vmatmul.mubr.bf16.gmra.mrb[0].mxu0 %v1148
        %v1187 = vpop.f32.mrb[0].mxu0
        %v1188 = vadd.f32 %v1133, %v1187
        %v1189 = vpop.f32.mrb[0].mxu0
        %v1190 = vpop.f32.mrb[0].mxu0
        %v1191 = vadd.f32 %v1133, %v1190
        %v1192 = vpop.f32.mrb[0].mxu0
        %1193 = vmatprep.mubr.bf16.mxu0 0
        %1194 = vmatmul.mubr.bf16.gmra.mrb[0].mxu0 %v1151
        %v1195 = vpop.f32.mrb[0].mxu0
        %v1196 = vadd.f32 %v1133, %v1195
        %v1197 = vpop.f32.mrb[0].mxu0
        %v1198 = vpop.f32.mrb[0].mxu0
        %v1199 = vadd.f32 %v1133, %v1198
        %v1200 = vpop.f32.mrb[0].mxu0
        %1201 = vdwg.mxu0
        %v1202 = vld [vmem:[#allocation6] sm:$0xff]
        %v1203 = vld [vmem:[#allocation6 + $0x8] sm:$0xff]
        %v1204 = vld [vmem:[#allocation6 + $0x10] sm:$0xff]
        %v1205 = vld [vmem:[#allocation6 + $0x18] sm:$0xff]
        %v1206 = vsub.f32 %v1188, %v1202
        %v1207 = vsub.f32 %v1191, %v1203
        %v1208 = vsub.f32 %v1196, %v1204
        %v1209 = vsub.f32 %v1199, %v1205
        %v1210 = vmul.f32 %v1206, 0.5
        %v1211 = vmul.f32 %v1207, 0.5
        %v1212 = vmul.f32 %v1208, 0.5
        %v1213 = vmul.f32 %v1209, 0.5
        %v1214 = vadd.f32 %v1202, %v1210
        %v1215 = vadd.f32 %v1203, %v1211
        %v1216 = vadd.f32 %v1204, %v1212
        %v1217 = vadd.f32 %v1205, %v1213
        %vm1218 = vcmp.ge.f32.partialorder %v1214, 1.0
        %vm1219 = vcmp.ge.f32.partialorder %v1215, 1.0
        %vm1220 = vcmp.ge.f32.partialorder %v1216, 1.0
        %vm1221 = vcmp.ge.f32.partialorder %v1217, 1.0
        %v1222 = vsel %vm1218, 0.0, %v1214
        %v1223 = vsel %vm1219, 0.0, %v1215
        %v1224 = vsel %vm1220, 0.0, %v1216
        %v1225 = vsel %vm1221, 0.0, %v1217
        %1226 = vst.msk [vmem:[#allocation6] sm:$0xff] %vm452, %v1222
        %1227 = vst.msk [vmem:[#allocation6 + $0x8] sm:$0xff] %vm452, %v1223
        %1228 = vst.msk [vmem:[#allocation6 + $0x10] sm:$0xff] %vm452, %v1224
        %1229 = vst.msk [vmem:[#allocation6 + $0x18] sm:$0xff] %vm452, %v1225
        %v1230 = vsel %vm1218, 1, 0
        %v1231 = vsel %vm1219, 1, 0
        %v1232 = vsel %vm1220, 1, 0
        %v1233 = vsel %vm1221, 1, 0
        %v1234 = vcvt.s32.f32 %v1230
        %v1235 = vcvt.s32.f32 %v1231
        %v1236 = vcvt.s32.f32 %v1232
        %v1237 = vcvt.s32.f32 %v1233
        %1238 = vst.msk [vmem:[%s377] sm:$0xff] %vm452, %v1234
        %1239 = vst.msk [vmem:[%s377 + $0x8] sm:$0xff] %vm452, %v1235
        %1240 = vst.msk [vmem:[%s377 + $0x10] sm:$0xff] %vm452, %v1236
        %1241 = vst.msk [vmem:[%s377 + $0x18] sm:$0xff] %vm452, %v1237
        %s1242 = sand.u32 %s263, 1
        %s1243 = scalar_lea.sflag [#allocation8], %s1242
        %s1244 = sand.u32 %s263, 1
        %s1245 = smul.addr %s1244, 32
        %s1246 = scalar_lea.vmem [#allocation7], %s1245
        // Predicated region
        $region65: #{ssa_forward.1} parent=59 // pred_check
          %p1247 = pneg %p273
        $region66: #{ssa_forward.1} parent=59 // pred_check_branch
          %1249 = sbr.rel (%p1247) target = $region68
        $region67: #{ssa_forward.1} parent=59 // pred_region
          %s1250 = smul.u32 4, %s28
          %s1252 = ssub.s32 512, 512
          %1253 = vsyncadd %s1243, %s1252
          %s1254 = smul.addr %s29, 4
          %s1255 = sadd.s32 %s1250, %s1254
          %s1256 = smul.addr %s1255, 128
          %s1257 = scalar_lea.hbm %s10, %s1256
          %s1258 = sshll.u32 %s1246, 4
          %s1259 = int_to_ptr.vmem [resolvable:$true] %s1258
          %1264 = dma.vmem_to_hbm [thread:$0]  %s1259, 512, %s1257, %s1243, 128, 128, 8
        $region68: #{ssa_forward.1} parent=59 // pred_fallthru
          _
      $region60: #{ssa_forward.1} parent=5 // pred_fallthru
        _
      %p1265 = scmp.le.s32.totalorder 2, %s19
      // Predicated region
      $region69: #{ssa_forward.1} parent=5 // pred_check
        %p1266 = pneg %p1265
      $region70: #{ssa_forward.1} parent=5 // pred_check_branch
        %1268 = sbr.rel (%p1266) target = $region72
      $region71: #{ssa_forward.1} parent=5 // pred_region
        %s1269 = ssub.s32 %s19, 2
        // Predicated region
        $region73: #{ssa_forward.1} parent=71 // pred_check
          %p1270 = pneg %p279
        $region74: #{ssa_forward.1} parent=71 // pred_check_branch
          %1272 = sbr.rel (%p1270) target = $region76
        $region75: #{ssa_forward.1} parent=71 // pred_region
          %s1273 = sand.u32 %s264, 1
          %s1274 = scalar_lea.sflag [#allocation8], %s1273
          %s1275 = sand.u32 %s264, 1
          %s1276 = smul.addr %s1275, 32
          %s1277 = scalar_lea.vmem [#allocation7], %s1276
          %1278 = dma.done %s1274, 512
        $region76: #{ssa_forward.1} parent=71 // pred_fallthru
          _
      $region72: #{ssa_forward.1} parent=5 // pred_fallthru
        _
    $region6: #{ssa_forward.1} parent=1 // loop_footer
      %s23 = sadd.s32 1, %s19
    $region7: #{ssa_forward.1} parent=1 // loop_footer_branch
      %18 = sbr.rel target = $region3
    $region8: #{ssa_forward.1} parent=1 // loop_exit
      _
    %1279 = vsyncpa [#allocation8], 1
    %s1280 = scalar_lea.sflag [#allocation8], 1
    %1281 = vsyncpa %s1280, 1

</llo_original>
